<compile_context>
chip_gen: v7x
topology: tpu7x:2x2x1
jax: 0.10.0
libtpu: 0.0.40
codegen_flags: <defaults>
</compile_context>

<pallas_src>
import functools

import jax
import jax.numpy as jnp
from jax import lax
from jax.experimental import pallas as pl
from jax.experimental.pallas import tpu as pltpu


def _mignn_kernel(x_ref, a_ref, wenc_ref, wbias_ref, wv_ref, wdec_ref, y_ref,
                  *, alpha, tol, max_iters):
    f32 = jnp.float32
    mm_dtype = wv_ref.dtype          # matmul-operand dtype (bf16 by default)

    a = a_ref[...]                   # (Np, Np), mm_dtype, lane-dense
    w_v = wv_ref[...]                # (Hp, Hp), mm_dtype

    # enc: Linear(in, hidden, bias=False)  (single MXU pass, f32 accumulate)
    xe = jnp.dot(x_ref[...], wenc_ref[...], preferred_element_type=f32)

    # F.dropout(x, p, training): inference-mode identity.
    # TODO(synk): training-mode dropout (RNG masking / 1/(1-p) scaling) omitted.

    # alpha * bias(x): loop-invariant -> hoisted out of the fixed-point loop.
    abx = alpha * jnp.dot(xe.astype(mm_dtype), wbias_ref[...],
                          preferred_element_type=f32)

    u0 = jnp.zeros_like(xe)          # u0 = zeros_like(x) in the reference

    def step(u):
        relu_u = jnp.maximum(u, 0.0)                     # nonlin(u) = ReLU(u)
        u_half = 2.0 * relu_u - u - abx
        # V(u_half, edge_index, edge_weight) = A @ (u_half @ W_V)
        # (bf16 MXU operands, f32 accumulation — dominant per-iteration cost)
        m = jnp.dot(u_half.astype(mm_dtype), w_v, preferred_element_type=f32)
        vu = jnp.dot(a, m.astype(mm_dtype), preferred_element_type=f32)
        un = 2.0 * (vu - relu_u) + u                     # fused update
        err = jnp.max(jnp.abs(u - un))                   # torch.norm(u-un, inf)
        return un, err

    def keep_going(err, itr):
        return jnp.logical_and(
            err > tol, jnp.logical_and(itr < max_iters, jnp.isfinite(err)))

    def cond(carry):
        _, err, itr = carry
        return keep_going(err, itr)

    def body(carry):
        u, _, itr = carry
        # 2x unrolled: two full updates per while-cond evaluation.  The second
        # update's matmuls do not depend on err1, so the inf-norm reduce
        # overlaps with MXU work; the final select preserves exact reference
        # stopping semantics (second update discarded if the first stopped).
        u1, err1 = step(u)
        u2, err2 = step(u1)
        cont1 = keep_going(err1, itr + 1)
        un = jnp.where(cont1, u2, u1)
        err = jnp.where(cont1, err2, err1)
        itr_next = itr + jnp.where(cont1, jnp.int32(2), jnp.int32(1))
        return (un, err, itr_next)

    u_final, _, _ = lax.while_loop(cond, body,
                                   (u0, jnp.float32(1e30), jnp.int32(0)))

    # x = act(igl(x, ...)); x = dec(x)   (lane-dense (Np, 128*) output slab)
    h = jnp.maximum(u_final, 0.0)
    y_ref[...] = jnp.dot(h.astype(mm_dtype), wdec_ref[...],
                         preferred_element_type=f32)


def _round_up(v, m):
    return (v + m - 1) // m * m


def _pad2d(w, rows, cols):
    out = jnp.zeros((rows, cols), jnp.float32)
    return out.at[:w.shape[0], :w.shape[1]].set(w.astype(jnp.float32))


def _vmem_capacity_bytes():
    """Generation-aware VMEM capacity (128 MiB v5e/v6e, 64 MiB per TC v7x)."""
    try:
        return int(pltpu.get_tpu_info().vmem_capacity_bytes)
    except Exception:
        return 64 * 1024 * 1024      # conservative fallback


def mignn_forward(x, edge_index, edge_weight, params, *, alpha=1.0, tol=1e-3,
                  max_iters=50, matmul_dtype=jnp.bfloat16):
    """x: (N, C_in) float; edge_index: (2, E) int32; edge_weight: (E,) float."""
    n, c_in = x.shape
    hidden = params["w_enc"].shape[1]
    out_ch = params["w_dec"].shape[1]

    # Lane-dense padding: N (lane/contraction dim of the dominant A @ m matmul)
    # and all channel dims padded to multiples of 128.
    n_pad = _round_up(n, 128)
    cin_pad = _round_up(c_in, 128)
    h_pad = _round_up(hidden, 128)
    out_pad = _round_up(out_ch, 128)

    xp = _pad2d(x, n_pad, cin_pad).astype(matmul_dtype)

    # Densify the sparse graph into an (n_pad, n_pad) adjacency, stored in the
    # matmul dtype (halves residency / DMA vs f32).
    a = jnp.zeros((n_pad, n_pad), jnp.float32).at[
        edge_index[0], edge_index[1]].add(edge_weight.astype(jnp.float32))
    a = a.astype(matmul_dtype)

    w_enc = _pad2d(params["w_enc"], cin_pad, h_pad).astype(matmul_dtype)
    w_bias = _pad2d(params["w_bias"], h_pad, h_pad).astype(matmul_dtype)
    w_v = _pad2d(params["w_v"], h_pad, h_pad).astype(matmul_dtype)
    w_dec = _pad2d(params["w_dec"], h_pad, out_pad).astype(matmul_dtype)

    # Resident VMEM estimate: bf16 inputs + f32 output + ~8 live (N, H) f32
    # temps (+ transient bf16 casts).
    mm_bytes = jnp.dtype(matmul_dtype).itemsize
    vmem_est = (xp.size * mm_bytes + a.size * mm_bytes
                + (w_enc.size + w_bias.size + w_v.size + w_dec.size) * mm_bytes
                + n_pad * out_pad * 4
                + 8 * n_pad * h_pad * (4 + mm_bytes))

    capacity = _vmem_capacity_bytes()
    vmem_limit = int(min(max(int(1.5 * vmem_est), 32 * 1024 * 1024),
                         int(0.9 * capacity)))
    if vmem_est > vmem_limit:
        # TODO(synk): switch to the A-streaming (pl.ANY + emit_pipeline) path
        # instead of failing once the dense adjacency no longer fits VMEM.
        raise ValueError(
            f"dense adjacency does not fit VMEM: need ~{vmem_est} B resident, "
            f"limit {vmem_limit} B (capacity {capacity} B)")

    kernel = functools.partial(_mignn_kernel, alpha=float(alpha),
                               tol=float(tol), max_iters=int(max_iters))
    vmem = pl.BlockSpec(memory_space=pltpu.MemorySpace.VMEM)
    out = pl.pallas_call(
        kernel,
        out_shape=jax.ShapeDtypeStruct((n_pad, out_pad), jnp.float32),
        in_specs=[vmem] * 6,
        out_specs=vmem,
        compiler_params=pltpu.CompilerParams(vmem_limit_bytes=vmem_limit),
    )(xp, a, w_enc, w_bias, w_v, w_dec)

    return out[:n, :out_ch]


def init_params(key, in_channels, hidden_channels, out_channels):
    k1, k2, k3, k4 = jax.random.split(key, 4)
    scale = 0.1  # keep the implicit iteration contractive
    return {
        # PyTorch Linear weights are (out, in); stored here pre-transposed.
        "w_enc": scale * jax.random.normal(k1, (in_channels, hidden_channels), jnp.float32),
        "w_bias": scale * jax.random.normal(k2, (hidden_channels, hidden_channels), jnp.float32),
        "w_v": scale * jax.random.normal(k3, (hidden_channels, hidden_channels), jnp.float32),
        "w_dec": scale * jax.random.normal(k4, (hidden_channels, out_channels), jnp.float32),
    }


if __name__ == "__main__":
    key = jax.random.PRNGKey(0)
    kx, ke, kw, kp = jax.random.split(key, 4)

    N, C_IN, HIDDEN, C_OUT, E = 16, 8, 32, 4, 48

    x = jax.random.normal(kx, (N, C_IN), jnp.float32)
    edge_index = jax.random.randint(ke, (2, E), 0, N, dtype=jnp.int32)
    edge_weight = 0.1 * jax.random.uniform(kw, (E,), jnp.float32)

    params = init_params(kp, C_IN, HIDDEN, C_OUT)

    # tol kept at 1e-3: bf16 matmul operands plateau the inf-norm error around
    # ~1e-3; tighter tol would silently spin to max_iters every call.
    y = mignn_forward(x, edge_index, edge_weight, params,
                      alpha=1.0, tol=1e-3, max_iters=50)
    jax.block_until_ready(y)
    assert y.shape == (N, C_OUT) and bool(jnp.all(jnp.isfinite(y)))
    print("KERNEL_OK")
</pallas_src>

<mosaic_0001>
module attributes {stable_mosaic.version = 11 : i64} {
  func.func @_mignn_kernel(%arg0: memref<128x128xbf16, #tpu.memory_space<vmem>>, %arg1: memref<128x128xbf16, #tpu.memory_space<vmem>>, %arg2: memref<128x128xbf16, #tpu.memory_space<vmem>>, %arg3: memref<128x128xbf16, #tpu.memory_space<vmem>>, %arg4: memref<128x128xbf16, #tpu.memory_space<vmem>>, %arg5: memref<128x128xbf16, #tpu.memory_space<vmem>>, %arg6: memref<128x128xf32, #tpu.memory_space<vmem>>) attributes {dimension_semantics = [], scalar_prefetch = 0 : i64, scratch_operands = 0 : i64, tpu.core_type = #tpu.core_type<tc>} {
    %c0 = arith.constant 0 : index
    %c0_0 = arith.constant 0 : index
    %0 = vector.load %arg1[%c0, %c0_0] : memref<128x128xbf16, #tpu.memory_space<vmem>>, vector<128x128xbf16>
    %c0_1 = arith.constant 0 : index
    %c0_2 = arith.constant 0 : index
    %1 = vector.load %arg4[%c0_1, %c0_2] : memref<128x128xbf16, #tpu.memory_space<vmem>>, vector<128x128xbf16>
    %c0_3 = arith.constant 0 : index
    %c0_4 = arith.constant 0 : index
    %2 = vector.load %arg0[%c0_3, %c0_4] : memref<128x128xbf16, #tpu.memory_space<vmem>>, vector<128x128xbf16>
    %c0_5 = arith.constant 0 : index
    %c0_6 = arith.constant 0 : index
    %3 = vector.load %arg2[%c0_5, %c0_6] : memref<128x128xbf16, #tpu.memory_space<vmem>>, vector<128x128xbf16>
    %cst = arith.constant dense<0.000000e+00> : vector<128x128xf32>
    %4 = tpu.matmul %2, %3, %cst {dimension_numbers = #tpu.dot_dimension_numbers<[1], [0], [0], [1], [0, 0, 1, 1], [], []>} : vector<128x128xbf16>, vector<128x128xbf16>, vector<128x128xf32> -> vector<128x128xf32>
    %5 = arith.truncf %4 : vector<128x128xf32> to vector<128x128xbf16>
    %c0_7 = arith.constant 0 : index
    %c0_8 = arith.constant 0 : index
    %6 = vector.load %arg3[%c0_7, %c0_8] : memref<128x128xbf16, #tpu.memory_space<vmem>>, vector<128x128xbf16>
    %cst_9 = arith.constant dense<0.000000e+00> : vector<128x128xf32>
    %7 = tpu.matmul %5, %6, %cst_9 {dimension_numbers = #tpu.dot_dimension_numbers<[1], [0], [0], [1], [0, 0, 1, 1], [], []>} : vector<128x128xbf16>, vector<128x128xbf16>, vector<128x128xf32> -> vector<128x128xf32>
    %cst_10 = arith.constant 1.000000e+00 : f32
    %8 = vector.broadcast %cst_10 : f32 to vector<128x128xf32>
    %9 = arith.mulf %8, %7 : vector<128x128xf32>
    %cst_11 = arith.constant 0.000000e+00 : f32
    %10 = vector.broadcast %cst_11 : f32 to vector<128x128xf32>
    %cst_12 = arith.constant 1.000000e+30 : f32
    %c0_i32 = arith.constant 0 : i32
    %11:3 = scf.while (%arg7 = %10, %arg8 = %cst_12, %arg9 = %c0_i32) : (vector<128x128xf32>, f32, i32) -> (vector<128x128xf32>, f32, i32) {
      %cst_19 = arith.constant 1.000000e-03 : f32
      %18 = arith.cmpf ogt, %arg8, %cst_19 : f32
      %c50_i32 = arith.constant 50 : i32
      %19 = arith.cmpi slt, %arg9, %c50_i32 : i32
      %20 = tpu.weird %arg8 : f32 -> i1
      %true = arith.constant true
      %21 = arith.xori %20, %true : i1
      %22 = arith.andi %19, %21 : i1
      %23 = arith.andi %18, %22 : i1
      scf.condition(%23) %arg7, %arg8, %arg9 : vector<128x128xf32>, f32, i32
    } do {
    ^bb0(%arg7: vector<128x128xf32>, %arg8: f32, %arg9: i32):
      %cst_19 = arith.constant 0.000000e+00 : f32
      %18 = vector.broadcast %cst_19 : f32 to vector<128x128xf32>
      %19 = arith.maximumf %arg7, %18 : vector<128x128xf32>
      %cst_20 = arith.constant 2.000000e+00 : f32
      %20 = vector.broadcast %cst_20 : f32 to vector<128x128xf32>
      %21 = arith.mulf %20, %19 : vector<128x128xf32>
      %22 = arith.subf %21, %arg7 : vector<128x128xf32>
      %23 = arith.subf %22, %9 : vector<128x128xf32>
      %24 = arith.truncf %23 : vector<128x128xf32> to vector<128x128xbf16>
      %cst_21 = arith.constant dense<0.000000e+00> : vector<128x128xf32>
      %25 = tpu.matmul %24, %1, %cst_21 {dimension_numbers = #tpu.dot_dimension_numbers<[1], [0], [0], [1], [0, 0, 1, 1], [], []>} : vector<128x128xbf16>, vector<128x128xbf16>, vector<128x128xf32> -> vector<128x128xf32>
      %26 = arith.truncf %25 : vector<128x128xf32> to vector<128x128xbf16>
      %cst_22 = arith.constant dense<0.000000e+00> : vector<128x128xf32>
      %27 = tpu.matmul %0, %26, %cst_22 {dimension_numbers = #tpu.dot_dimension_numbers<[1], [0], [0], [1], [0, 0, 1, 1], [], []>} : vector<128x128xbf16>, vector<128x128xbf16>, vector<128x128xf32> -> vector<128x128xf32>
      %28 = arith.subf %27, %19 : vector<128x128xf32>
      %cst_23 = arith.constant 2.000000e+00 : f32
      %29 = vector.broadcast %cst_23 : f32 to vector<128x128xf32>
      %30 = arith.mulf %29, %28 : vector<128x128xf32>
      %31 = arith.addf %30, %arg7 : vector<128x128xf32>
      %32 = arith.subf %arg7, %31 : vector<128x128xf32>
      %33 = math.absf %32 : vector<128x128xf32>
      %34 = vector.shape_cast %33 : vector<128x128xf32> to vector<1x128x128xf32>
      %cst_24 = arith.constant dense<0xFF800000> : vector<1xf32>
      %35 = vector.multi_reduction <maximumf>, %34, %cst_24 [1, 2] : vector<1x128x128xf32> to vector<1xf32>
      %36 = vector.shape_cast %35 : vector<1xf32> to vector<1x1x1xf32>
      %37 = vector.extract %36[0, 0, 0] : f32 from vector<1x1x1xf32>
      %cst_25 = arith.constant 0.000000e+00 : f32
      %38 = vector.broadcast %cst_25 : f32 to vector<128x128xf32>
      %39 = arith.maximumf %31, %38 : vector<128x128xf32>
      %cst_26 = arith.constant 2.000000e+00 : f32
      %40 = vector.broadcast %cst_26 : f32 to vector<128x128xf32>
      %41 = arith.mulf %40, %39 : vector<128x128xf32>
      %42 = arith.subf %41, %31 : vector<128x128xf32>
      %43 = arith.subf %42, %9 : vector<128x128xf32>
      %44 = arith.truncf %43 : vector<128x128xf32> to vector<128x128xbf16>
      %cst_27 = arith.constant dense<0.000000e+00> : vector<128x128xf32>
      %45 = tpu.matmul %44, %1, %cst_27 {dimension_numbers = #tpu.dot_dimension_numbers<[1], [0], [0], [1], [0, 0, 1, 1], [], []>} : vector<128x128xbf16>, vector<128x128xbf16>, vector<128x128xf32> -> vector<128x128xf32>
      %46 = arith.truncf %45 : vector<128x128xf32> to vector<128x128xbf16>
      %cst_28 = arith.constant dense<0.000000e+00> : vector<128x128xf32>
      %47 = tpu.matmul %0, %46, %cst_28 {dimension_numbers = #tpu.dot_dimension_numbers<[1], [0], [0], [1], [0, 0, 1, 1], [], []>} : vector<128x128xbf16>, vector<128x128xbf16>, vector<128x128xf32> -> vector<128x128xf32>
      %48 = arith.subf %47, %39 : vector<128x128xf32>
      %cst_29 = arith.constant 2.000000e+00 : f32
      %49 = vector.broadcast %cst_29 : f32 to vector<128x128xf32>
      %50 = arith.mulf %49, %48 : vector<128x128xf32>
      %51 = arith.addf %50, %31 : vector<128x128xf32>
      %52 = arith.subf %31, %51 : vector<128x128xf32>
      %53 = math.absf %52 : vector<128x128xf32>
      %54 = vector.shape_cast %53 : vector<128x128xf32> to vector<1x128x128xf32>
      %cst_30 = arith.constant dense<0xFF800000> : vector<1xf32>
      %55 = vector.multi_reduction <maximumf>, %54, %cst_30 [1, 2] : vector<1x128x128xf32> to vector<1xf32>
      %56 = vector.shape_cast %55 : vector<1xf32> to vector<1x1x1xf32>
      %57 = vector.extract %56[0, 0, 0] : f32 from vector<1x1x1xf32>
      %c1_i32 = arith.constant 1 : i32
      %58 = arith.addi %arg9, %c1_i32 : i32
      %cst_31 = arith.constant 1.000000e-03 : f32
      %59 = arith.cmpf ogt, %37, %cst_31 : f32
      %c50_i32 = arith.constant 50 : i32
      %60 = arith.cmpi slt, %58, %c50_i32 : i32
      %61 = tpu.weird %37 : f32 -> i1
      %true = arith.constant true
      %62 = arith.xori %61, %true : i1
      %63 = arith.andi %60, %62 : i1
      %64 = arith.andi %59, %63 : i1
      %65 = arith.select %64, %51, %31 : vector<128x128xf32>
      %66 = arith.select %64, %57, %37 : f32
      %c2_i32 = arith.constant 2 : i32
      %c1_i32_32 = arith.constant 1 : i32
      %67 = arith.select %64, %c2_i32, %c1_i32_32 : i32
      %68 = arith.addi %arg9, %67 : i32
      scf.yield %65, %66, %68 : vector<128x128xf32>, f32, i32
    }
    %cst_13 = arith.constant 0.000000e+00 : f32
    %12 = vector.broadcast %cst_13 : f32 to vector<128x128xf32>
    %13 = arith.maximumf %11#0, %12 : vector<128x128xf32>
    %14 = arith.truncf %13 : vector<128x128xf32> to vector<128x128xbf16>
    %c0_14 = arith.constant 0 : index
    %c0_15 = arith.constant 0 : index
    %15 = vector.load %arg5[%c0_14, %c0_15] : memref<128x128xbf16, #tpu.memory_space<vmem>>, vector<128x128xbf16>
    %cst_16 = arith.constant dense<0.000000e+00> : vector<128x128xf32>
    %16 = tpu.matmul %14, %15, %cst_16 {dimension_numbers = #tpu.dot_dimension_numbers<[1], [0], [0], [1], [0, 0, 1, 1], [], []>} : vector<128x128xbf16>, vector<128x128xbf16>, vector<128x128xf32> -> vector<128x128xf32>
    %c0_17 = arith.constant 0 : index
    %c0_18 = arith.constant 0 : index
    %17 = vector.load %arg6[%c0_17, %c0_18] : memref<128x128xf32, #tpu.memory_space<vmem>>, vector<128x128xf32>
    tpu.vector_store %arg6[%c0_17, %c0_18], %16 {strides = array<i32>} : memref<128x128xf32, #tpu.memory_space<vmem>>, vector<128x128xf32>,
    return
  }
}

</mosaic_0001>

<llo_original>
// kernel: tpu_custom_call.1
$region0: #{tpu_custom_call.1}
  #allocation0 [shape = 'u32[]', space=smem, size = 0x4, offset = 0x4, fixed_abs, tag = 'smem constant byte address 0x4 - core index']
  #allocation1 [shape = 'u32[144,128]{1,0:T(1,128)}', space=vmem, size = 0x12000, scoped, tag = 'internal scratch']
  %s0 = inlined_call_operand.hbm [shape: bf16[128,128], index: 0, kind: input, shape index: {}]
  %s1 = inlined_call_operand.hbm [shape: bf16[128,128], index: 1, kind: input, shape index: {}]
  %s2 = inlined_call_operand.hbm [shape: bf16[128,128], index: 2, kind: input, shape index: {}]
  %s3 = inlined_call_operand.hbm [shape: bf16[128,128], index: 3, kind: input, shape index: {}]
  %s4 = inlined_call_operand.hbm [shape: bf16[128,128], index: 4, kind: input, shape index: {}]
  %s5 = inlined_call_operand.hbm [shape: bf16[128,128], index: 5, kind: input, shape index: {}]
  %s6 = inlined_call_operand.hbm [shape: f32[128,128], index: 6, kind: output, shape index: {}]
  %s7 = sld [smem:[#allocation0]]
  $region65: #{tpu_custom_call.1} parent=0
    _
  %s9 = ssub.s32 1, %s7
  %s10 = scalar_select 0, %s9, %s7
  $region1: #{tpu_custom_call.1} parent=0
    #allocation2 [shape = 'u8[32768]{0}', space=vmem, size = 0x8000, scoped, tag = 'input window, operand 0, single buffered']
    #allocation3 [shape = 's32[1]{0}', space=sflag, size = 0x4, scoped, tag = 'scoped memory for tpu_custom_call.1']
    #allocation4 [shape = 's32[1]{0}', space=sflag, size = 0x4, scoped, tag = 'scoped memory for tpu_custom_call.1']
    #allocation5 [shape = 'u8[32768]{0}', space=vmem, size = 0x8000, scoped, tag = 'input window, operand 1, single buffered']
    #allocation6 [shape = 's32[1]{0}', space=sflag, size = 0x4, scoped, tag = 'scoped memory for tpu_custom_call.1']
    #allocation7 [shape = 'u8[32768]{0}', space=vmem, size = 0x8000, scoped, tag = 'input window, operand 2, single buffered']
    #allocation8 [shape = 'u8[32768]{0}', space=vmem, size = 0x8000, scoped, tag = 'input window, operand 3, single buffered']
    #allocation9 [shape = 's32[1]{0}', space=sflag, size = 0x4, scoped, tag = 'scoped memory for tpu_custom_call.1']
    #allocation10 [shape = 'u8[32768]{0}', space=vmem, size = 0x8000, scoped, tag = 'input window, operand 4, single buffered']
    #allocation11 [shape = 'u8[32768]{0}', space=vmem, size = 0x8000, scoped, tag = 'input window, operand 5, single buffered']
    #allocation12 [shape = 's32[1]{0}', space=sflag, size = 0x4, scoped, tag = 'scoped memory for tpu_custom_call.1']
    #allocation13 [shape = 'u8[65536]{0}', space=vmem, size = 0x10000, scoped, tag = 'output window, operand 0, single buffered']
    %11 = vsyncpa [#allocation3], 0
    %12 = vsyncpa [#allocation6], 0
    %13 = vsyncpa [#allocation9], 0
    %14 = vsyncpa [#allocation12], 0
    %15 = vsyncpa [#allocation4], 0
    // Predicated region
    $region2: #{tpu_custom_call.1} parent=1 // pred_check
      _
    $region3: #{tpu_custom_call.1} parent=1 // pred_check_branch
      %17 = sbr.rel (0) target = $region5
    $region4: #{tpu_custom_call.1} parent=1 // pred_region
      %s19 = ssub.s32 1024, 1024
      %20 = vsyncadd [#allocation3], %s19
      %s21 = sshll.u32 [#allocation2], 4
      %s22 = int_to_ptr.vmem [resolvable:$true] %s21
      %27 = dma.hbm_to_vmem [thread:$0]  %s0, 1024, %s22, [#allocation3], 64, 64, 4
    $region5: #{tpu_custom_call.1} parent=1 // pred_fallthru
      _
    // Predicated region
    $region6: #{tpu_custom_call.1} parent=1 // pred_check
      _
    $region7: #{tpu_custom_call.1} parent=1 // pred_check_branch
      %29 = sbr.rel (0) target = $region9
    $region8: #{tpu_custom_call.1} parent=1 // pred_region
      %s31 = ssub.s32 1024, 1024
      %32 = vsyncadd [#allocation6], %s31
      %s33 = sshll.u32 [#allocation5], 4
      %s34 = int_to_ptr.vmem [resolvable:$true] %s33
      %39 = dma.hbm_to_vmem [thread:$0]  %s1, 1024, %s34, [#allocation6], 64, 64, 4
    $region9: #{tpu_custom_call.1} parent=1 // pred_fallthru
      _
    // Predicated region
    $region10: #{tpu_custom_call.1} parent=1 // pred_check
      _
    $region11: #{tpu_custom_call.1} parent=1 // pred_check_branch
      %41 = sbr.rel (0) target = $region13
    $region12: #{tpu_custom_call.1} parent=1 // pred_region
      %s43 = ssub.s32 1024, 1024
      %44 = vsyncadd [#allocation6], %s43
      %s45 = sshll.u32 [#allocation7], 4
      %s46 = int_to_ptr.vmem [resolvable:$true] %s45
      %51 = dma.hbm_to_vmem [thread:$0]  %s2, 1024, %s46, [#allocation6], 64, 64, 4
    $region13: #{tpu_custom_call.1} parent=1 // pred_fallthru
      _
    // Predicated region
    $region14: #{tpu_custom_call.1} parent=1 // pred_check
      _
    $region15: #{tpu_custom_call.1} parent=1 // pred_check_branch
      %53 = sbr.rel (0) target = $region17
    $region16: #{tpu_custom_call.1} parent=1 // pred_region
      %s55 = ssub.s32 1024, 1024
      %56 = vsyncadd [#allocation9], %s55
      %s57 = sshll.u32 [#allocation8], 4
      %s58 = int_to_ptr.vmem [resolvable:$true] %s57
      %63 = dma.hbm_to_vmem [thread:$0]  %s3, 1024, %s58, [#allocation9], 64, 64, 4
    $region17: #{tpu_custom_call.1} parent=1 // pred_fallthru
      _
    // Predicated region
    $region18: #{tpu_custom_call.1} parent=1 // pred_check
      _
    $region19: #{tpu_custom_call.1} parent=1 // pred_check_branch
      %65 = sbr.rel (0) target = $region21
    $region20: #{tpu_custom_call.1} parent=1 // pred_region
      %s67 = ssub.s32 1024, 1024
      %68 = vsyncadd [#allocation9], %s67
      %s69 = sshll.u32 [#allocation10], 4
      %s70 = int_to_ptr.vmem [resolvable:$true] %s69
      %75 = dma.hbm_to_vmem [thread:$0]  %s4, 1024, %s70, [#allocation9], 64, 64, 4
    $region21: #{tpu_custom_call.1} parent=1 // pred_fallthru
      _
    // Predicated region
    $region22: #{tpu_custom_call.1} parent=1 // pred_check
      _
    $region23: #{tpu_custom_call.1} parent=1 // pred_check_branch
      %77 = sbr.rel (0) target = $region25
    $region24: #{tpu_custom_call.1} parent=1 // pred_region
      %s79 = ssub.s32 1024, 1024
      %80 = vsyncadd [#allocation12], %s79
      %s81 = sshll.u32 [#allocation11], 4
      %s82 = int_to_ptr.vmem [resolvable:$true] %s81
      %87 = dma.hbm_to_vmem [thread:$0]  %s5, 1024, %s82, [#allocation12], 64, 64, 4
    $region25: #{tpu_custom_call.1} parent=1 // pred_fallthru
      _
    // Predicated region
    $region26: #{tpu_custom_call.1} parent=1 // pred_check
      _
    $region27: #{tpu_custom_call.1} parent=1 // pred_check_branch
      %89 = sbr.rel (0) target = $region29
    $region28: #{tpu_custom_call.1} parent=1 // pred_region
      %90 = dma.done [#allocation3], 1024
    $region29: #{tpu_custom_call.1} parent=1 // pred_fallthru
      _
    // Predicated region
    $region30: #{tpu_custom_call.1} parent=1 // pred_check
      _
    $region31: #{tpu_custom_call.1} parent=1 // pred_check_branch
      %92 = sbr.rel (0) target = $region33
    $region32: #{tpu_custom_call.1} parent=1 // pred_region
      %93 = dma.done [#allocation6], 1024
    $region33: #{tpu_custom_call.1} parent=1 // pred_fallthru
      _
    // Predicated region
    $region34: #{tpu_custom_call.1} parent=1 // pred_check
      _
    $region35: #{tpu_custom_call.1} parent=1 // pred_check_branch
      %95 = sbr.rel (0) target = $region37
    $region36: #{tpu_custom_call.1} parent=1 // pred_region
      %96 = dma.done [#allocation6], 1024
    $region37: #{tpu_custom_call.1} parent=1 // pred_fallthru
      _
    // Predicated region
    $region38: #{tpu_custom_call.1} parent=1 // pred_check
      _
    $region39: #{tpu_custom_call.1} parent=1 // pred_check_branch
      %98 = sbr.rel (0) target = $region41
    $region40: #{tpu_custom_call.1} parent=1 // pred_region
      %99 = dma.done [#allocation9], 1024
    $region41: #{tpu_custom_call.1} parent=1 // pred_fallthru
      _
    // Predicated region
    $region42: #{tpu_custom_call.1} parent=1 // pred_check
      _
    $region43: #{tpu_custom_call.1} parent=1 // pred_check_branch
      %101 = sbr.rel (0) target = $region45
    $region44: #{tpu_custom_call.1} parent=1 // pred_region
      %102 = dma.done [#allocation9], 1024
    $region45: #{tpu_custom_call.1} parent=1 // pred_fallthru
      _
    // Predicated region
    $region46: #{tpu_custom_call.1} parent=1 // pred_check
      _
    $region47: #{tpu_custom_call.1} parent=1 // pred_check_branch
      %104 = sbr.rel (0) target = $region49
    $region48: #{tpu_custom_call.1} parent=1 // pred_region
      %105 = dma.done [#allocation12], 1024
    $region49: #{tpu_custom_call.1} parent=1 // pred_fallthru
      _
    %v107 = vld [vmem:[#allocation5] sm:$0xf]
    %v108 = vld [vmem:[#allocation5 + $0x4] sm:$0xf]
    %v109 = vld [vmem:[#allocation5 + $0x8] sm:$0xf]
    %v110 = vld [vmem:[#allocation5 + $0xc] sm:$0xf]
    %v111 = vld [vmem:[#allocation5 + $0x10] sm:$0xf]
    %v112 = vld [vmem:[#allocation5 + $0x14] sm:$0xf]
    %v113 = vld [vmem:[#allocation5 + $0x18] sm:$0xf]
    %v114 = vld [vmem:[#allocation5 + $0x1c] sm:$0xf]
    %v115 = vld [vmem:[#allocation5 + $0x20] sm:$0xf]
    %v116 = vld [vmem:[#allocation5 + $0x24] sm:$0xf]
    %v117 = vld [vmem:[#allocation5 + $0x28] sm:$0xf]
    %v118 = vld [vmem:[#allocation5 + $0x2c] sm:$0xf]
    %v119 = vld [vmem:[#allocation5 + $0x30] sm:$0xf]
    %v120 = vld [vmem:[#allocation5 + $0x34] sm:$0xf]
    %v121 = vld [vmem:[#allocation5 + $0x38] sm:$0xf]
    %v122 = vld [vmem:[#allocation5 + $0x3c] sm:$0xf]
    %v123 = vld [vmem:[#allocation10] sm:$0xf]
    %v124 = vld [vmem:[#allocation10 + $0x4] sm:$0xf]
    %v125 = vld [vmem:[#allocation10 + $0x8] sm:$0xf]
    %v126 = vld [vmem:[#allocation10 + $0xc] sm:$0xf]
    %v127 = vld [vmem:[#allocation10 + $0x10] sm:$0xf]
    %v128 = vld [vmem:[#allocation10 + $0x14] sm:$0xf]
    %v129 = vld [vmem:[#allocation10 + $0x18] sm:$0xf]
    %v130 = vld [vmem:[#allocation10 + $0x1c] sm:$0xf]
    %v131 = vld [vmem:[#allocation10 + $0x20] sm:$0xf]
    %v132 = vld [vmem:[#allocation10 + $0x24] sm:$0xf]
    %v133 = vld [vmem:[#allocation10 + $0x28] sm:$0xf]
    %v134 = vld [vmem:[#allocation10 + $0x2c] sm:$0xf]
    %v135 = vld [vmem:[#allocation10 + $0x30] sm:$0xf]
    %v136 = vld [vmem:[#allocation10 + $0x34] sm:$0xf]
    %v137 = vld [vmem:[#allocation10 + $0x38] sm:$0xf]
    %v138 = vld [vmem:[#allocation10 + $0x3c] sm:$0xf]
    %v139 = vld [vmem:[#allocation2] sm:$0xf]
    %v140 = vld [vmem:[#allocation2 + $0x4] sm:$0xf]
    %v141 = vld [vmem:[#allocation2 + $0x8] sm:$0xf]
    %v142 = vld [vmem:[#allocation2 + $0xc] sm:$0xf]
    %v143 = vld [vmem:[#allocation2 + $0x10] sm:$0xf]
    %v144 = vld [vmem:[#allocation2 + $0x14] sm:$0xf]
    %v145 = vld [vmem:[#allocation2 + $0x18] sm:$0xf]
    %v146 = vld [vmem:[#allocation2 + $0x1c] sm:$0xf]
    %v147 = vld [vmem:[#allocation2 + $0x20] sm:$0xf]
    %v148 = vld [vmem:[#allocation2 + $0x24] sm:$0xf]
    %v149 = vld [vmem:[#allocation2 + $0x28] sm:$0xf]
    %v150 = vld [vmem:[#allocation2 + $0x2c] sm:$0xf]
    %v151 = vld [vmem:[#allocation2 + $0x30] sm:$0xf]
    %v152 = vld [vmem:[#allocation2 + $0x34] sm:$0xf]
    %v153 = vld [vmem:[#allocation2 + $0x38] sm:$0xf]
    %v154 = vld [vmem:[#allocation2 + $0x3c] sm:$0xf]
    %v155 = vld [vmem:[#allocation7] sm:$0xf]
    %v156 = vld [vmem:[#allocation7 + $0x4] sm:$0xf]
    %v157 = vld [vmem:[#allocation7 + $0x8] sm:$0xf]
    %v158 = vld [vmem:[#allocation7 + $0xc] sm:$0xf]
    %v159 = vld [vmem:[#allocation7 + $0x10] sm:$0xf]
    %v160 = vld [vmem:[#allocation7 + $0x14] sm:$0xf]
    %v161 = vld [vmem:[#allocation7 + $0x18] sm:$0xf]
    %v162 = vld [vmem:[#allocation7 + $0x1c] sm:$0xf]
    %v163 = vld [vmem:[#allocation7 + $0x20] sm:$0xf]
    %v164 = vld [vmem:[#allocation7 + $0x24] sm:$0xf]
    %v165 = vld [vmem:[#allocation7 + $0x28] sm:$0xf]
    %v166 = vld [vmem:[#allocation7 + $0x2c] sm:$0xf]
    %v167 = vld [vmem:[#allocation7 + $0x30] sm:$0xf]
    %v168 = vld [vmem:[#allocation7 + $0x34] sm:$0xf]
    %v169 = vld [vmem:[#allocation7 + $0x38] sm:$0xf]
    %v170 = vld [vmem:[#allocation7 + $0x3c] sm:$0xf]
    %v187 = vunpack.c.l.b16 %v139
    %v188 = vunpack.c.l.b16 %v140
    %v189 = vunpack.c.l.b16 %v141
    %v190 = vunpack.c.l.b16 %v142
    %v191 = vunpack.c.l.b16 %v143
    %v192 = vunpack.c.l.b16 %v144
    %v193 = vunpack.c.l.b16 %v145
    %v194 = vunpack.c.l.b16 %v146
    %v195 = vunpack.c.l.b16 %v147
    %v196 = vunpack.c.l.b16 %v148
    %v197 = vunpack.c.l.b16 %v149
    %v198 = vunpack.c.l.b16 %v150
    %v199 = vunpack.c.l.b16 %v151
    %v200 = vunpack.c.l.b16 %v152
    %v201 = vunpack.c.l.b16 %v153
    %v202 = vunpack.c.l.b16 %v154
    %v203 = vpack.c.b16 %v188, %v187
    %v204 = vpack.c.b16 %v190, %v189
    %v205 = vpack.c.b16 %v192, %v191
    %v206 = vpack.c.b16 %v194, %v193
    %v207 = vpack.c.b16 %v196, %v195
    %v208 = vpack.c.b16 %v198, %v197
    %v209 = vpack.c.b16 %v200, %v199
    %v210 = vpack.c.b16 %v202, %v201
    %v235 = vunpack.c.l.b16 %v155
    %v236 = vunpack.c.l.b16 %v156
    %v237 = vunpack.c.l.b16 %v157
    %v238 = vunpack.c.l.b16 %v158
    %v239 = vunpack.c.l.b16 %v159
    %v240 = vunpack.c.l.b16 %v160
    %v241 = vunpack.c.l.b16 %v161
    %v242 = vunpack.c.l.b16 %v162
    %v243 = vunpack.c.l.b16 %v163
    %v244 = vunpack.c.l.b16 %v164
    %v245 = vunpack.c.l.b16 %v165
    %v246 = vunpack.c.l.b16 %v166
    %v247 = vunpack.c.l.b16 %v167
    %v248 = vunpack.c.l.b16 %v168
    %v249 = vunpack.c.l.b16 %v169
    %v250 = vunpack.c.l.b16 %v170
    %v251 = vpack.c.b16 %v236, %v235
    %v252 = vpack.c.b16 %v238, %v237
    %v253 = vpack.c.b16 %v240, %v239
    %v254 = vpack.c.b16 %v242, %v241
    %v255 = vpack.c.b16 %v244, %v243
    %v256 = vpack.c.b16 %v246, %v245
    %v257 = vpack.c.b16 %v248, %v247
    %v258 = vpack.c.b16 %v250, %v249
    %267 = vmatprep.subr.bf16.mxu0 0
    %268 = vmatpush1.bf16.msra.mxu0 %v251
    %269 = vmatprep.subr.bf16.mxu0 0
    %270 = vmatpush1.bf16.msra.mxu0 %v252
    %271 = vmatprep.subr.bf16.mxu0 0
    %272 = vmatpush1.bf16.msra.mxu0 %v253
    %273 = vmatprep.subr.bf16.mxu0 0
    %274 = vmatpush1.bf16.msra.mxu0 %v254
    %275 = vmatprep.subr.bf16.mxu0 0
    %276 = vmatpush1.bf16.msra.mxu0 %v255
    %277 = vmatprep.subr.bf16.mxu0 0
    %278 = vmatpush1.bf16.msra.mxu0 %v256
    %279 = vmatprep.subr.bf16.mxu0 0
    %280 = vmatpush1.bf16.msra.mxu0 %v257
    %281 = vmatprep.subr.bf16.mxu0 0
    %282 = vmatpush1.bf16.msra.mxu0 %v258
    %283 = vmatprep.subr.bf16.mxu0 0
    %284 = vmatpush1.bf16.msra.mxu0 0
    %285 = vmatprep.subr.bf16.mxu0 0
    %286 = vmatpush1.bf16.msra.mxu0 0
    %287 = vmatprep.subr.bf16.mxu0 0
    %288 = vmatpush1.bf16.msra.mxu0 0
    %289 = vmatprep.subr.bf16.mxu0 0
    %290 = vmatpush1.bf16.msra.mxu0 0
    %291 = vmatprep.subr.bf16.mxu0 0
    %292 = vmatpush1.bf16.msra.mxu0 0
    %293 = vmatprep.subr.bf16.mxu0 0
    %294 = vmatpush1.bf16.msra.mxu0 0
    %295 = vmatprep.subr.bf16.mxu0 0
    %296 = vmatpush1.bf16.msra.mxu0 0
    %297 = vmatprep.subr.bf16.mxu0 0
    %298 = vmatpush1.bf16.msra.mxu0 0
    %299 = vmatprep.mubr.bf16.mxu0 0
    %300 = vmatmul.mubr.bf16.gmra.mrb[0].mxu0 %v203
    %v301 = vpop.f32.mrb[0].mxu0
    %v302 = vadd.f32 0.0, %v301
    %v303 = vpop.f32.mrb[0].mxu0
    %v304 = vpop.f32.mrb[0].mxu0
    %v305 = vadd.f32 0.0, %v304
    %v306 = vpop.f32.mrb[0].mxu0
    %307 = vmatprep.mubr.bf16.mxu0 0
    %308 = vmatmul.mubr.bf16.gmra.mrb[0].mxu0 %v204
    %v309 = vpop.f32.mrb[0].mxu0
    %v310 = vadd.f32 0.0, %v309
    %v311 = vpop.f32.mrb[0].mxu0
    %v312 = vpop.f32.mrb[0].mxu0
    %v313 = vadd.f32 0.0, %v312
    %v314 = vpop.f32.mrb[0].mxu0
    %315 = vmatprep.mubr.bf16.mxu0 0
    %316 = vmatmul.mubr.bf16.gmra.mrb[0].mxu0 %v205
    %v317 = vpop.f32.mrb[0].mxu0
    %v318 = vadd.f32 0.0, %v317
    %v319 = vpop.f32.mrb[0].mxu0
    %v320 = vpop.f32.mrb[0].mxu0
    %v321 = vadd.f32 0.0, %v320
    %v322 = vpop.f32.mrb[0].mxu0
    %323 = vmatprep.mubr.bf16.mxu0 0
    %324 = vmatmul.mubr.bf16.gmra.mrb[0].mxu0 %v206
    %v325 = vpop.f32.mrb[0].mxu0
    %v326 = vadd.f32 0.0, %v325
    %v327 = vpop.f32.mrb[0].mxu0
    %v328 = vpop.f32.mrb[0].mxu0
    %v329 = vadd.f32 0.0, %v328
    %v330 = vpop.f32.mrb[0].mxu0
    %331 = vmatprep.mubr.bf16.mxu0 0
    %332 = vmatmul.mubr.bf16.gmra.mrb[0].mxu0 %v207
    %v333 = vpop.f32.mrb[0].mxu0
    %v334 = vadd.f32 0.0, %v333
    %v335 = vpop.f32.mrb[0].mxu0
    %v336 = vpop.f32.mrb[0].mxu0
    %v337 = vadd.f32 0.0, %v336
    %v338 = vpop.f32.mrb[0].mxu0
    %339 = vmatprep.mubr.bf16.mxu0 0
    %340 = vmatmul.mubr.bf16.gmra.mrb[0].mxu0 %v208
    %v341 = vpop.f32.mrb[0].mxu0
    %v342 = vadd.f32 0.0, %v341
    %v343 = vpop.f32.mrb[0].mxu0
    %v344 = vpop.f32.mrb[0].mxu0
    %v345 = vadd.f32 0.0, %v344
    %v346 = vpop.f32.mrb[0].mxu0
    %347 = vmatprep.mubr.bf16.mxu0 0
    %348 = vmatmul.mubr.bf16.gmra.mrb[0].mxu0 %v209
    %v349 = vpop.f32.mrb[0].mxu0
    %v350 = vadd.f32 0.0, %v349
    %v351 = vpop.f32.mrb[0].mxu0
    %v352 = vpop.f32.mrb[0].mxu0
    %v353 = vadd.f32 0.0, %v352
    %v354 = vpop.f32.mrb[0].mxu0
    %355 = vmatprep.mubr.bf16.mxu0 0
    %356 = vmatmul.mubr.bf16.gmra.mrb[0].mxu0 %v210
    %v357 = vpop.f32.mrb[0].mxu0
    %v358 = vadd.f32 0.0, %v357
    %v359 = vpop.f32.mrb[0].mxu0
    %v360 = vpop.f32.mrb[0].mxu0
    %v361 = vadd.f32 0.0, %v360
    %v362 = vpop.f32.mrb[0].mxu0
    %363 = vdwg.mxu0
    %v364 = vpack.c.bf16 %v305, %v302
    %v365 = vpack.c.bf16 %v313, %v310
    %v366 = vpack.c.bf16 %v321, %v318
    %v367 = vpack.c.bf16 %v329, %v326
    %v368 = vpack.c.bf16 %v337, %v334
    %v369 = vpack.c.bf16 %v345, %v342
    %v370 = vpack.c.bf16 %v353, %v350
    %v371 = vpack.c.bf16 %v361, %v358
    %v372 = vld [vmem:[#allocation8] sm:$0xf]
    %v373 = vld [vmem:[#allocation8 + $0x4] sm:$0xf]
    %v374 = vld [vmem:[#allocation8 + $0x8] sm:$0xf]
    %v375 = vld [vmem:[#allocation8 + $0xc] sm:$0xf]
    %v376 = vld [vmem:[#allocation8 + $0x10] sm:$0xf]
    %v377 = vld [vmem:[#allocation8 + $0x14] sm:$0xf]
    %v378 = vld [vmem:[#allocation8 + $0x18] sm:$0xf]
    %v379 = vld [vmem:[#allocation8 + $0x1c] sm:$0xf]
    %v380 = vld [vmem:[#allocation8 + $0x20] sm:$0xf]
    %v381 = vld [vmem:[#allocation8 + $0x24] sm:$0xf]
    %v382 = vld [vmem:[#allocation8 + $0x28] sm:$0xf]
    %v383 = vld [vmem:[#allocation8 + $0x2c] sm:$0xf]
    %v384 = vld [vmem:[#allocation8 + $0x30] sm:$0xf]
    %v385 = vld [vmem:[#allocation8 + $0x34] sm:$0xf]
    %v386 = vld [vmem:[#allocation8 + $0x38] sm:$0xf]
    %v387 = vld [vmem:[#allocation8 + $0x3c] sm:$0xf]
    %v404 = vunpack.c.l.b16 %v372
    %v405 = vunpack.c.l.b16 %v373
    %v406 = vunpack.c.l.b16 %v374
    %v407 = vunpack.c.l.b16 %v375
    %v408 = vunpack.c.l.b16 %v376
    %v409 = vunpack.c.l.b16 %v377
    %v410 = vunpack.c.l.b16 %v378
    %v411 = vunpack.c.l.b16 %v379
    %v412 = vunpack.c.l.b16 %v380
    %v413 = vunpack.c.l.b16 %v381
    %v414 = vunpack.c.l.b16 %v382
    %v415 = vunpack.c.l.b16 %v383
    %v416 = vunpack.c.l.b16 %v384
    %v417 = vunpack.c.l.b16 %v385
    %v418 = vunpack.c.l.b16 %v386
    %v419 = vunpack.c.l.b16 %v387
    %v420 = vpack.c.b16 %v405, %v404
    %v421 = vpack.c.b16 %v407, %v406
    %v422 = vpack.c.b16 %v409, %v408
    %v423 = vpack.c.b16 %v411, %v410
    %v424 = vpack.c.b16 %v413, %v412
    %v425 = vpack.c.b16 %v415, %v414
    %v426 = vpack.c.b16 %v417, %v416
    %v427 = vpack.c.b16 %v419, %v418
    %436 = vmatprep.subr.bf16.mxu0 0
    %437 = vmatpush1.bf16.msra.mxu0 %v420
    %438 = vmatprep.subr.bf16.mxu0 0
    %439 = vmatpush1.bf16.msra.mxu0 %v421
    %440 = vmatprep.subr.bf16.mxu0 0
    %441 = vmatpush1.bf16.msra.mxu0 %v422
    %442 = vmatprep.subr.bf16.mxu0 0
    %443 = vmatpush1.bf16.msra.mxu0 %v423
    %444 = vmatprep.subr.bf16.mxu0 0
    %445 = vmatpush1.bf16.msra.mxu0 %v424
    %446 = vmatprep.subr.bf16.mxu0 0
    %447 = vmatpush1.bf16.msra.mxu0 %v425
    %448 = vmatprep.subr.bf16.mxu0 0
    %449 = vmatpush1.bf16.msra.mxu0 %v426
    %450 = vmatprep.subr.bf16.mxu0 0
    %451 = vmatpush1.bf16.msra.mxu0 %v427
    %452 = vmatprep.subr.bf16.mxu0 0
    %453 = vmatpush1.bf16.msra.mxu0 0
    %454 = vmatprep.subr.bf16.mxu0 0
    %455 = vmatpush1.bf16.msra.mxu0 0
    %456 = vmatprep.subr.bf16.mxu0 0
    %457 = vmatpush1.bf16.msra.mxu0 0
    %458 = vmatprep.subr.bf16.mxu0 0
    %459 = vmatpush1.bf16.msra.mxu0 0
    %460 = vmatprep.subr.bf16.mxu0 0
    %461 = vmatpush1.bf16.msra.mxu0 0
    %462 = vmatprep.subr.bf16.mxu0 0
    %463 = vmatpush1.bf16.msra.mxu0 0
    %464 = vmatprep.subr.bf16.mxu0 0
    %465 = vmatpush1.bf16.msra.mxu0 0
    %466 = vmatprep.subr.bf16.mxu0 0
    %467 = vmatpush1.bf16.msra.mxu0 0
    %468 = vmatprep.mubr.bf16.mxu0 0
    %469 = vmatmul.mubr.bf16.gmra.mrb[0].mxu0 %v364
    %v470 = vpop.f32.mrb[0].mxu0
    %v471 = vadd.f32 0.0, %v470
    %v472 = vpop.f32.mrb[0].mxu0
    %v473 = vpop.f32.mrb[0].mxu0
    %v474 = vadd.f32 0.0, %v473
    %v475 = vpop.f32.mrb[0].mxu0
    %476 = vmatprep.mubr.bf16.mxu0 0
    %477 = vmatmul.mubr.bf16.gmra.mrb[0].mxu0 %v365
    %v478 = vpop.f32.mrb[0].mxu0
    %v479 = vadd.f32 0.0, %v478
    %v480 = vpop.f32.mrb[0].mxu0
    %v481 = vpop.f32.mrb[0].mxu0
    %v482 = vadd.f32 0.0, %v481
    %v483 = vpop.f32.mrb[0].mxu0
    %484 = vmatprep.mubr.bf16.mxu0 0
    %485 = vmatmul.mubr.bf16.gmra.mrb[0].mxu0 %v366
    %v486 = vpop.f32.mrb[0].mxu0
    %v487 = vadd.f32 0.0, %v486
    %v488 = vpop.f32.mrb[0].mxu0
    %v489 = vpop.f32.mrb[0].mxu0
    %v490 = vadd.f32 0.0, %v489
    %v491 = vpop.f32.mrb[0].mxu0
    %492 = vmatprep.mubr.bf16.mxu0 0
    %493 = vmatmul.mubr.bf16.gmra.mrb[0].mxu0 %v367
    %v494 = vpop.f32.mrb[0].mxu0
    %v495 = vadd.f32 0.0, %v494
    %v496 = vpop.f32.mrb[0].mxu0
    %v497 = vpop.f32.mrb[0].mxu0
    %v498 = vadd.f32 0.0, %v497
    %v499 = vpop.f32.mrb[0].mxu0
    %500 = vmatprep.mubr.bf16.mxu0 0
    %501 = vmatmul.mubr.bf16.gmra.mrb[0].mxu0 %v368
    %v502 = vpop.f32.mrb[0].mxu0
    %v503 = vadd.f32 0.0, %v502
    %v504 = vpop.f32.mrb[0].mxu0
    %v505 = vpop.f32.mrb[0].mxu0
    %v506 = vadd.f32 0.0, %v505
    %v507 = vpop.f32.mrb[0].mxu0
    %508 = vmatprep.mubr.bf16.mxu0 0
    %509 = vmatmul.mubr.bf16.gmra.mrb[0].mxu0 %v369
    %v510 = vpop.f32.mrb[0].mxu0
    %v511 = vadd.f32 0.0, %v510
    %v512 = vpop.f32.mrb[0].mxu0
    %v513 = vpop.f32.mrb[0].mxu0
    %v514 = vadd.f32 0.0, %v513
    %v515 = vpop.f32.mrb[0].mxu0
    %516 = vmatprep.mubr.bf16.mxu0 0
    %517 = vmatmul.mubr.bf16.gmra.mrb[0].mxu0 %v370
    %v518 = vpop.f32.mrb[0].mxu0
    %v519 = vadd.f32 0.0, %v518
    %v520 = vpop.f32.mrb[0].mxu0
    %v521 = vpop.f32.mrb[0].mxu0
    %v522 = vadd.f32 0.0, %v521
    %v523 = vpop.f32.mrb[0].mxu0
    %524 = vmatprep.mubr.bf16.mxu0 0
    %525 = vmatmul.mubr.bf16.gmra.mrb[0].mxu0 %v371
    %v526 = vpop.f32.mrb[0].mxu0
    %v527 = vadd.f32 0.0, %v526
    %v528 = vpop.f32.mrb[0].mxu0
    %v529 = vpop.f32.mrb[0].mxu0
    %v530 = vadd.f32 0.0, %v529
    %v531 = vpop.f32.mrb[0].mxu0
    %532 = vdwg.mxu0
    // While loop
    $region50: #{tpu_custom_call.1} parent=1 // loop_pre_header
      _
    $region51: #{tpu_custom_call.1} parent=1 // loop_header
      %v534 = vphi 0.0, %v1426
      %v535 = vphi 0.0, %v1427
      %v536 = vphi 0.0, %v1428
      %v537 = vphi 0.0, %v1429
      %v538 = vphi 0.0, %v1430
      %v539 = vphi 0.0, %v1431
      %v540 = vphi 0.0, %v1432
      %v541 = vphi 0.0, %v1433
      %v542 = vphi 0.0, %v1434
      %v543 = vphi 0.0, %v1435
      %v544 = vphi 0.0, %v1436
      %v545 = vphi 0.0, %v1437
      %v546 = vphi 0.0, %v1438
      %v547 = vphi 0.0, %v1439
      %v548 = vphi 0.0, %v1440
      %v549 = vphi 0.0, %v1441
      %s550 = sphi 1e+30, %s1442
      %s551 = sphi 0, %s1444
      %p552 = scmp.gt.f32.partialorder %s550, 0.001
      %p553 = scmp.lt.s32.totalorder %s551, 50
      %p554 = sweird.f32 %s550
      %p555 = pneg %p554
      %p556 = pnand %p553, %p555
      %p557 = pneg %p556
      %p558 = pnand %p552, %p557
      %p559 = pneg %p558
    $region52: #{tpu_custom_call.1} parent=1 // loop_header_branch
      %561 = sbr.rel (%p558) target = $region56
    $region53: #{tpu_custom_call.1} parent=1 // loop_body
      %v562 = vmax.f32 %v534, 0.0
      %v563 = vmax.f32 %v535, 0.0
      %v564 = vmax.f32 %v536, 0.0
      %v565 = vmax.f32 %v537, 0.0
      %v566 = vmax.f32 %v538, 0.0
      %v567 = vmax.f32 %v539, 0.0
      %v568 = vmax.f32 %v540, 0.0
      %v569 = vmax.f32 %v541, 0.0
      %v570 = vmax.f32 %v542, 0.0
      %v571 = vmax.f32 %v543, 0.0
      %v572 = vmax.f32 %v544, 0.0
      %v573 = vmax.f32 %v545, 0.0
      %v574 = vmax.f32 %v546, 0.0
      %v575 = vmax.f32 %v547, 0.0
      %v576 = vmax.f32 %v548, 0.0
      %v577 = vmax.f32 %v549, 0.0
      %v578 = vmul.f32 %v562, 2.0
      %v579 = vmul.f32 %v563, 2.0
      %v580 = vmul.f32 %v564, 2.0
      %v581 = vmul.f32 %v565, 2.0
      %v582 = vmul.f32 %v566, 2.0
      %v583 = vmul.f32 %v567, 2.0
      %v584 = vmul.f32 %v568, 2.0
      %v585 = vmul.f32 %v569, 2.0
      %v586 = vmul.f32 %v570, 2.0
      %v587 = vmul.f32 %v571, 2.0
      %v588 = vmul.f32 %v572, 2.0
      %v589 = vmul.f32 %v573, 2.0
      %v590 = vmul.f32 %v574, 2.0
      %v591 = vmul.f32 %v575, 2.0
      %v592 = vmul.f32 %v576, 2.0
      %v593 = vmul.f32 %v577, 2.0
      %v594 = vsub.f32 %v578, %v534
      %v595 = vsub.f32 %v579, %v535
      %v596 = vsub.f32 %v580, %v536
      %v597 = vsub.f32 %v581, %v537
      %v598 = vsub.f32 %v582, %v538
      %v599 = vsub.f32 %v583, %v539
      %v600 = vsub.f32 %v584, %v540
      %v601 = vsub.f32 %v585, %v541
      %v602 = vsub.f32 %v586, %v542
      %v603 = vsub.f32 %v587, %v543
      %v604 = vsub.f32 %v588, %v544
      %v605 = vsub.f32 %v589, %v545
      %v606 = vsub.f32 %v590, %v546
      %v607 = vsub.f32 %v591, %v547
      %v608 = vsub.f32 %v592, %v548
      %v609 = vsub.f32 %v593, %v549
      %v610 = vsub.f32 %v594, %v471
      %v611 = vsub.f32 %v595, %v474
      %v612 = vsub.f32 %v596, %v479
      %v613 = vsub.f32 %v597, %v482
      %v614 = vsub.f32 %v598, %v487
      %v615 = vsub.f32 %v599, %v490
      %v616 = vsub.f32 %v600, %v495
      %v617 = vsub.f32 %v601, %v498
      %v618 = vsub.f32 %v602, %v503
      %v619 = vsub.f32 %v603, %v506
      %v620 = vsub.f32 %v604, %v511
      %v621 = vsub.f32 %v605, %v514
      %v622 = vsub.f32 %v606, %v519
      %v623 = vsub.f32 %v607, %v522
      %v624 = vsub.f32 %v608, %v527
      %v625 = vsub.f32 %v609, %v530
      %v626 = vpack.c.bf16 %v611, %v610
      %v627 = vpack.c.bf16 %v613, %v612
      %v628 = vpack.c.bf16 %v615, %v614
      %v629 = vpack.c.bf16 %v617, %v616
      %v630 = vpack.c.bf16 %v619, %v618
      %v631 = vpack.c.bf16 %v621, %v620
      %v632 = vpack.c.bf16 %v623, %v622
      %v633 = vpack.c.bf16 %v625, %v624
      %v650 = vunpack.c.l.b16 %v123
      %v651 = vunpack.c.l.b16 %v124
      %v652 = vunpack.c.l.b16 %v125
      %v653 = vunpack.c.l.b16 %v126
      %v654 = vunpack.c.l.b16 %v127
      %v655 = vunpack.c.l.b16 %v128
      %v656 = vunpack.c.l.b16 %v129
      %v657 = vunpack.c.l.b16 %v130
      %v658 = vunpack.c.l.b16 %v131
      %v659 = vunpack.c.l.b16 %v132
      %v660 = vunpack.c.l.b16 %v133
      %v661 = vunpack.c.l.b16 %v134
      %v662 = vunpack.c.l.b16 %v135
      %v663 = vunpack.c.l.b16 %v136
      %v664 = vunpack.c.l.b16 %v137
      %v665 = vunpack.c.l.b16 %v138
      %v666 = vpack.c.b16 %v651, %v650
      %v667 = vpack.c.b16 %v653, %v652
      %v668 = vpack.c.b16 %v655, %v654
      %v669 = vpack.c.b16 %v657, %v656
      %v670 = vpack.c.b16 %v659, %v658
      %v671 = vpack.c.b16 %v661, %v660
      %v672 = vpack.c.b16 %v663, %v662
      %v673 = vpack.c.b16 %v665, %v664
      %682 = vmatprep.subr.bf16.mxu0 0
      %683 = vmatpush1.bf16.msra.mxu0 %v666
      %684 = vmatprep.subr.bf16.mxu0 0
      %685 = vmatpush1.bf16.msra.mxu0 %v667
      %686 = vmatprep.subr.bf16.mxu0 0
      %687 = vmatpush1.bf16.msra.mxu0 %v668
      %688 = vmatprep.subr.bf16.mxu0 0
      %689 = vmatpush1.bf16.msra.mxu0 %v669
      %690 = vmatprep.subr.bf16.mxu0 0
      %691 = vmatpush1.bf16.msra.mxu0 %v670
      %692 = vmatprep.subr.bf16.mxu0 0
      %693 = vmatpush1.bf16.msra.mxu0 %v671
      %694 = vmatprep.subr.bf16.mxu0 0
      %695 = vmatpush1.bf16.msra.mxu0 %v672
      %696 = vmatprep.subr.bf16.mxu0 0
      %697 = vmatpush1.bf16.msra.mxu0 %v673
      %698 = vmatprep.subr.bf16.mxu0 0
      %699 = vmatpush1.bf16.msra.mxu0 0
      %700 = vmatprep.subr.bf16.mxu0 0
      %701 = vmatpush1.bf16.msra.mxu0 0
      %702 = vmatprep.subr.bf16.mxu0 0
      %703 = vmatpush1.bf16.msra.mxu0 0
      %704 = vmatprep.subr.bf16.mxu0 0
      %705 = vmatpush1.bf16.msra.mxu0 0
      %706 = vmatprep.subr.bf16.mxu0 0
      %707 = vmatpush1.bf16.msra.mxu0 0
      %708 = vmatprep.subr.bf16.mxu0 0
      %709 = vmatpush1.bf16.msra.mxu0 0
      %710 = vmatprep.subr.bf16.mxu0 0
      %711 = vmatpush1.bf16.msra.mxu0 0
      %712 = vmatprep.subr.bf16.mxu0 0
      %713 = vmatpush1.bf16.msra.mxu0 0
      %714 = vmatprep.mubr.bf16.mxu0 0
      %715 = vmatmul.mubr.bf16.gmra.mrb[0].mxu0 %v626
      %v716 = vpop.f32.mrb[0].mxu0
      %v717 = vadd.f32 0.0, %v716
      %v718 = vpop.f32.mrb[0].mxu0
      %v719 = vpop.f32.mrb[0].mxu0
      %v720 = vadd.f32 0.0, %v719
      %v721 = vpop.f32.mrb[0].mxu0
      %722 = vmatprep.mubr.bf16.mxu0 0
      %723 = vmatmul.mubr.bf16.gmra.mrb[0].mxu0 %v627
      %v724 = vpop.f32.mrb[0].mxu0
      %v725 = vadd.f32 0.0, %v724
      %v726 = vpop.f32.mrb[0].mxu0
      %v727 = vpop.f32.mrb[0].mxu0
      %v728 = vadd.f32 0.0, %v727
      %v729 = vpop.f32.mrb[0].mxu0
      %730 = vmatprep.mubr.bf16.mxu0 0
      %731 = vmatmul.mubr.bf16.gmra.mrb[0].mxu0 %v628
      %v732 = vpop.f32.mrb[0].mxu0
      %v733 = vadd.f32 0.0, %v732
      %v734 = vpop.f32.mrb[0].mxu0
      %v735 = vpop.f32.mrb[0].mxu0
      %v736 = vadd.f32 0.0, %v735
      %v737 = vpop.f32.mrb[0].mxu0
      %738 = vmatprep.mubr.bf16.mxu0 0
      %739 = vmatmul.mubr.bf16.gmra.mrb[0].mxu0 %v629
      %v740 = vpop.f32.mrb[0].mxu0
      %v741 = vadd.f32 0.0, %v740
      %v742 = vpop.f32.mrb[0].mxu0
      %v743 = vpop.f32.mrb[0].mxu0
      %v744 = vadd.f32 0.0, %v743
      %v745 = vpop.f32.mrb[0].mxu0
      %746 = vmatprep.mubr.bf16.mxu0 0
      %747 = vmatmul.mubr.bf16.gmra.mrb[0].mxu0 %v630
      %v748 = vpop.f32.mrb[0].mxu0
      %v749 = vadd.f32 0.0, %v748
      %v750 = vpop.f32.mrb[0].mxu0
      %v751 = vpop.f32.mrb[0].mxu0
      %v752 = vadd.f32 0.0, %v751
      %v753 = vpop.f32.mrb[0].mxu0
      %754 = vmatprep.mubr.bf16.mxu0 0
      %755 = vmatmul.mubr.bf16.gmra.mrb[0].mxu0 %v631
      %v756 = vpop.f32.mrb[0].mxu0
      %v757 = vadd.f32 0.0, %v756
      %v758 = vpop.f32.mrb[0].mxu0
      %v759 = vpop.f32.mrb[0].mxu0
      %v760 = vadd.f32 0.0, %v759
      %v761 = vpop.f32.mrb[0].mxu0
      %762 = vmatprep.mubr.bf16.mxu0 0
      %763 = vmatmul.mubr.bf16.gmra.mrb[0].mxu0 %v632
      %v764 = vpop.f32.mrb[0].mxu0
      %v765 = vadd.f32 0.0, %v764
      %v766 = vpop.f32.mrb[0].mxu0
      %v767 = vpop.f32.mrb[0].mxu0
      %v768 = vadd.f32 0.0, %v767
      %v769 = vpop.f32.mrb[0].mxu0
      %770 = vmatprep.mubr.bf16.mxu0 0
      %771 = vmatmul.mubr.bf16.gmra.mrb[0].mxu0 %v633
      %v772 = vpop.f32.mrb[0].mxu0
      %v773 = vadd.f32 0.0, %v772
      %v774 = vpop.f32.mrb[0].mxu0
      %v775 = vpop.f32.mrb[0].mxu0
      %v776 = vadd.f32 0.0, %v775
      %v777 = vpop.f32.mrb[0].mxu0
      %778 = vdwg.mxu0
      %v779 = vpack.c.bf16 %v720, %v717
      %v780 = vpack.c.bf16 %v728, %v725
      %v781 = vpack.c.bf16 %v736, %v733
      %v782 = vpack.c.bf16 %v744, %v741
      %v783 = vpack.c.bf16 %v752, %v749
      %v784 = vpack.c.bf16 %v760, %v757
      %v785 = vpack.c.bf16 %v768, %v765
      %v786 = vpack.c.bf16 %v776, %v773
      %v803 = vunpack.c.l.b16 %v107
      %v804 = vunpack.c.l.b16 %v108
      %v805 = vunpack.c.l.b16 %v109
      %v806 = vunpack.c.l.b16 %v110
      %v807 = vunpack.c.l.b16 %v111
      %v808 = vunpack.c.l.b16 %v112
      %v809 = vunpack.c.l.b16 %v113
      %v810 = vunpack.c.l.b16 %v114
      %v811 = vunpack.c.l.b16 %v115
      %v812 = vunpack.c.l.b16 %v116
      %v813 = vunpack.c.l.b16 %v117
      %v814 = vunpack.c.l.b16 %v118
      %v815 = vunpack.c.l.b16 %v119
      %v816 = vunpack.c.l.b16 %v120
      %v817 = vunpack.c.l.b16 %v121
      %v818 = vunpack.c.l.b16 %v122
      %v819 = vpack.c.b16 %v804, %v803
      %v820 = vpack.c.b16 %v806, %v805
      %v821 = vpack.c.b16 %v808, %v807
      %v822 = vpack.c.b16 %v810, %v809
      %v823 = vpack.c.b16 %v812, %v811
      %v824 = vpack.c.b16 %v814, %v813
      %v825 = vpack.c.b16 %v816, %v815
      %v826 = vpack.c.b16 %v818, %v817
      %835 = vmatprep.subr.bf16.mxu0 0
      %836 = vmatpush1.bf16.msra.mxu0 %v779
      %837 = vmatprep.subr.bf16.mxu0 0
      %838 = vmatpush1.bf16.msra.mxu0 %v780
      %839 = vmatprep.subr.bf16.mxu0 0
      %840 = vmatpush1.bf16.msra.mxu0 %v781
      %841 = vmatprep.subr.bf16.mxu0 0
      %842 = vmatpush1.bf16.msra.mxu0 %v782
      %843 = vmatprep.subr.bf16.mxu0 0
      %844 = vmatpush1.bf16.msra.mxu0 %v783
      %845 = vmatprep.subr.bf16.mxu0 0
      %846 = vmatpush1.bf16.msra.mxu0 %v784
      %847 = vmatprep.subr.bf16.mxu0 0
      %848 = vmatpush1.bf16.msra.mxu0 %v785
      %849 = vmatprep.subr.bf16.mxu0 0
      %850 = vmatpush1.bf16.msra.mxu0 %v786
      %851 = vmatprep.subr.bf16.mxu0 0
      %852 = vmatpush1.bf16.msra.mxu0 0
      %853 = vmatprep.subr.bf16.mxu0 0
      %854 = vmatpush1.bf16.msra.mxu0 0
      %855 = vmatprep.subr.bf16.mxu0 0
      %856 = vmatpush1.bf16.msra.mxu0 0
      %857 = vmatprep.subr.bf16.mxu0 0
      %858 = vmatpush1.bf16.msra.mxu0 0
      %859 = vmatprep.subr.bf16.mxu0 0
      %860 = vmatpush1.bf16.msra.mxu0 0
      %861 = vmatprep.subr.bf16.mxu0 0
      %862 = vmatpush1.bf16.msra.mxu0 0
      %863 = vmatprep.subr.bf16.mxu0 0
      %864 = vmatpush1.bf16.msra.mxu0 0
      %865 = vmatprep.subr.bf16.mxu0 0
      %866 = vmatpush1.bf16.msra.mxu0 0
      %867 = vmatprep.mubr.bf16.mxu0 0
      %868 = vmatmul.mubr.bf16.gmra.mrb[0].mxu0 %v819
      %v869 = vpop.f32.mrb[0].mxu0
      %v870 = vadd.f32 0.0, %v869
      %v871 = vpop.f32.mrb[0].mxu0
      %v872 = vpop.f32.mrb[0].mxu0
      %v873 = vadd.f32 0.0, %v872
      %v874 = vpop.f32.mrb[0].mxu0
      %875 = vmatprep.mubr.bf16.mxu0 0
      %876 = vmatmul.mubr.bf16.gmra.mrb[0].mxu0 %v820
      %v877 = vpop.f32.mrb[0].mxu0
      %v878 = vadd.f32 0.0, %v877
      %v879 = vpop.f32.mrb[0].mxu0
      %v880 = vpop.f32.mrb[0].mxu0
      %v881 = vadd.f32 0.0, %v880
      %v882 = vpop.f32.mrb[0].mxu0
      %883 = vmatprep.mubr.bf16.mxu0 0
      %884 = vmatmul.mubr.bf16.gmra.mrb[0].mxu0 %v821
      %v885 = vpop.f32.mrb[0].mxu0
      %v886 = vadd.f32 0.0, %v885
      %v887 = vpop.f32.mrb[0].mxu0
      %v888 = vpop.f32.mrb[0].mxu0
      %v889 = vadd.f32 0.0, %v888
      %v890 = vpop.f32.mrb[0].mxu0
      %891 = vmatprep.mubr.bf16.mxu0 0
      %892 = vmatmul.mubr.bf16.gmra.mrb[0].mxu0 %v822
      %v893 = vpop.f32.mrb[0].mxu0
      %v894 = vadd.f32 0.0, %v893
      %v895 = vpop.f32.mrb[0].mxu0
      %v896 = vpop.f32.mrb[0].mxu0
      %v897 = vadd.f32 0.0, %v896
      %v898 = vpop.f32.mrb[0].mxu0
      %899 = vmatprep.mubr.bf16.mxu0 0
      %900 = vmatmul.mubr.bf16.gmra.mrb[0].mxu0 %v823
      %v901 = vpop.f32.mrb[0].mxu0
      %v902 = vadd.f32 0.0, %v901
      %v903 = vpop.f32.mrb[0].mxu0
      %v904 = vpop.f32.mrb[0].mxu0
      %v905 = vadd.f32 0.0, %v904
      %v906 = vpop.f32.mrb[0].mxu0
      %907 = vmatprep.mubr.bf16.mxu0 0
      %908 = vmatmul.mubr.bf16.gmra.mrb[0].mxu0 %v824
      %v909 = vpop.f32.mrb[0].mxu0
      %v910 = vadd.f32 0.0, %v909
      %v911 = vpop.f32.mrb[0].mxu0
      %v912 = vpop.f32.mrb[0].mxu0
      %v913 = vadd.f32 0.0, %v912
      %v914 = vpop.f32.mrb[0].mxu0
      %915 = vmatprep.mubr.bf16.mxu0 0
      %916 = vmatmul.mubr.bf16.gmra.mrb[0].mxu0 %v825
      %v917 = vpop.f32.mrb[0].mxu0
      %v918 = vadd.f32 0.0, %v917
      %v919 = vpop.f32.mrb[0].mxu0
      %v920 = vpop.f32.mrb[0].mxu0
      %v921 = vadd.f32 0.0, %v920
      %v922 = vpop.f32.mrb[0].mxu0
      %923 = vmatprep.mubr.bf16.mxu0 0
      %924 = vmatmul.mubr.bf16.gmra.mrb[0].mxu0 %v826
      %v925 = vpop.f32.mrb[0].mxu0
      %v926 = vadd.f32 0.0, %v925
      %v927 = vpop.f32.mrb[0].mxu0
      %v928 = vpop.f32.mrb[0].mxu0
      %v929 = vadd.f32 0.0, %v928
      %v930 = vpop.f32.mrb[0].mxu0
      %931 = vdwg.mxu0
      %v932 = vsub.f32 %v870, %v562
      %v933 = vsub.f32 %v873, %v563
      %v934 = vsub.f32 %v878, %v564
      %v935 = vsub.f32 %v881, %v565
      %v936 = vsub.f32 %v886, %v566
      %v937 = vsub.f32 %v889, %v567
      %v938 = vsub.f32 %v894, %v568
      %v939 = vsub.f32 %v897, %v569
      %v940 = vsub.f32 %v902, %v570
      %v941 = vsub.f32 %v905, %v571
      %v942 = vsub.f32 %v910, %v572
      %v943 = vsub.f32 %v913, %v573
      %v944 = vsub.f32 %v918, %v574
      %v945 = vsub.f32 %v921, %v575
      %v946 = vsub.f32 %v926, %v576
      %v947 = vsub.f32 %v929, %v577
      %v948 = vmul.f32 %v932, 2.0
      %v949 = vmul.f32 %v933, 2.0
      %v950 = vmul.f32 %v934, 2.0
      %v951 = vmul.f32 %v935, 2.0
      %v952 = vmul.f32 %v936, 2.0
      %v953 = vmul.f32 %v937, 2.0
      %v954 = vmul.f32 %v938, 2.0
      %v955 = vmul.f32 %v939, 2.0
      %v956 = vmul.f32 %v940, 2.0
      %v957 = vmul.f32 %v941, 2.0
      %v958 = vmul.f32 %v942, 2.0
      %v959 = vmul.f32 %v943, 2.0
      %v960 = vmul.f32 %v944, 2.0
      %v961 = vmul.f32 %v945, 2.0
      %v962 = vmul.f32 %v946, 2.0
      %v963 = vmul.f32 %v947, 2.0
      %v964 = vadd.f32 %v948, %v534
      %v965 = vadd.f32 %v949, %v535
      %v966 = vadd.f32 %v950, %v536
      %v967 = vadd.f32 %v951, %v537
      %v968 = vadd.f32 %v952, %v538
      %v969 = vadd.f32 %v953, %v539
      %v970 = vadd.f32 %v954, %v540
      %v971 = vadd.f32 %v955, %v541
      %v972 = vadd.f32 %v956, %v542
      %v973 = vadd.f32 %v957, %v543
      %v974 = vadd.f32 %v958, %v544
      %v975 = vadd.f32 %v959, %v545
      %v976 = vadd.f32 %v960, %v546
      %v977 = vadd.f32 %v961, %v547
      %v978 = vadd.f32 %v962, %v548
      %v979 = vadd.f32 %v963, %v549
      %v980 = vsub.f32 %v534, %v964
      %v981 = vsub.f32 %v535, %v965
      %v982 = vsub.f32 %v536, %v966
      %v983 = vsub.f32 %v537, %v967
      %v984 = vsub.f32 %v538, %v968
      %v985 = vsub.f32 %v539, %v969
      %v986 = vsub.f32 %v540, %v970
      %v987 = vsub.f32 %v541, %v971
      %v988 = vsub.f32 %v542, %v972
      %v989 = vsub.f32 %v543, %v973
      %v990 = vsub.f32 %v544, %v974
      %v991 = vsub.f32 %v545, %v975
      %v992 = vsub.f32 %v546, %v976
      %v993 = vsub.f32 %v547, %v977
      %v994 = vsub.f32 %v548, %v978
      %v995 = vsub.f32 %v549, %v979
      %v996 = vand.u32 2147483647, %v980
      %v997 = vand.u32 2147483647, %v981
      %v998 = vand.u32 2147483647, %v982
      %v999 = vand.u32 2147483647, %v983
      %v1000 = vand.u32 2147483647, %v984
      %v1001 = vand.u32 2147483647, %v985
      %v1002 = vand.u32 2147483647, %v986
      %v1003 = vand.u32 2147483647, %v987
      %v1004 = vand.u32 2147483647, %v988
      %v1005 = vand.u32 2147483647, %v989
      %v1006 = vand.u32 2147483647, %v990
      %v1007 = vand.u32 2147483647, %v991
      %v1008 = vand.u32 2147483647, %v992
      %v1009 = vand.u32 2147483647, %v993
      %v1010 = vand.u32 2147483647, %v994
      %v1011 = vand.u32 2147483647, %v995
      %v1012 = vmax.f32 %v996, %v1000
      %v1013 = vmax.f32 %v997, %v1001
      %v1014 = vmax.f32 %v998, %v1002
      %v1015 = vmax.f32 %v999, %v1003
      %v1016 = vmax.f32 %v1012, %v1004
      %v1017 = vmax.f32 %v1013, %v1005
      %v1018 = vmax.f32 %v1014, %v1006
      %v1019 = vmax.f32 %v1015, %v1007
      %v1020 = vmax.f32 %v1016, %v1008
      %v1021 = vmax.f32 %v1017, %v1009
      %v1022 = vmax.f32 %v1018, %v1010
      %v1023 = vmax.f32 %v1019, %v1011
      %v1024 = vmax.f32 %v1020, %v1021
      %v1025 = vmax.f32 %v1022, %v1023
      %v1026 = vmax.f32 %v1024, %v1025
      %1027 = vmax.xlane.f32.xlu0 %v1026
      %v1028 = vpop.xlane.xlu0 %1027
      %v1029 = vrot.slane %v1028, 4
      %v1030 = vmax.f32 %v1028, %v1029
      %v1031 = vrot.slane %v1030, 2
      %v1032 = vmax.f32 %v1030, %v1031
      %v1033 = vrot.slane %v1032, 1
      %v1034 = vmax.f32 %v1032, %v1033
      %s1035 = vtos %v1034
      %v1036 = vmax.f32 %v964, 0.0
      %v1037 = vmax.f32 %v965, 0.0
      %v1038 = vmax.f32 %v966, 0.0
      %v1039 = vmax.f32 %v967, 0.0
      %v1040 = vmax.f32 %v968, 0.0
      %v1041 = vmax.f32 %v969, 0.0
      %v1042 = vmax.f32 %v970, 0.0
      %v1043 = vmax.f32 %v971, 0.0
      %v1044 = vmax.f32 %v972, 0.0
      %v1045 = vmax.f32 %v973, 0.0
      %v1046 = vmax.f32 %v974, 0.0
      %v1047 = vmax.f32 %v975, 0.0
      %v1048 = vmax.f32 %v976, 0.0
      %v1049 = vmax.f32 %v977, 0.0
      %v1050 = vmax.f32 %v978, 0.0
      %v1051 = vmax.f32 %v979, 0.0
      %v1052 = vmul.f32 %v1036, 2.0
      %v1053 = vmul.f32 %v1037, 2.0
      %v1054 = vmul.f32 %v1038, 2.0
      %v1055 = vmul.f32 %v1039, 2.0
      %v1056 = vmul.f32 %v1040, 2.0
      %v1057 = vmul.f32 %v1041, 2.0
      %v1058 = vmul.f32 %v1042, 2.0
      %v1059 = vmul.f32 %v1043, 2.0
      %v1060 = vmul.f32 %v1044, 2.0
      %v1061 = vmul.f32 %v1045, 2.0
      %v1062 = vmul.f32 %v1046, 2.0
      %v1063 = vmul.f32 %v1047, 2.0
      %v1064 = vmul.f32 %v1048, 2.0
      %v1065 = vmul.f32 %v1049, 2.0
      %v1066 = vmul.f32 %v1050, 2.0
      %v1067 = vmul.f32 %v1051, 2.0
      %v1068 = vsub.f32 %v1052, %v964
      %v1069 = vsub.f32 %v1053, %v965
      %v1070 = vsub.f32 %v1054, %v966
      %v1071 = vsub.f32 %v1055, %v967
      %v1072 = vsub.f32 %v1056, %v968
      %v1073 = vsub.f32 %v1057, %v969
      %v1074 = vsub.f32 %v1058, %v970
      %v1075 = vsub.f32 %v1059, %v971
      %v1076 = vsub.f32 %v1060, %v972
      %v1077 = vsub.f32 %v1061, %v973
      %v1078 = vsub.f32 %v1062, %v974
      %v1079 = vsub.f32 %v1063, %v975
      %v1080 = vsub.f32 %v1064, %v976
      %v1081 = vsub.f32 %v1065, %v977
      %v1082 = vsub.f32 %v1066, %v978
      %v1083 = vsub.f32 %v1067, %v979
      %v1084 = vsub.f32 %v1068, %v471
      %v1085 = vsub.f32 %v1069, %v474
      %v1086 = vsub.f32 %v1070, %v479
      %v1087 = vsub.f32 %v1071, %v482
      %v1088 = vsub.f32 %v1072, %v487
      %v1089 = vsub.f32 %v1073, %v490
      %v1090 = vsub.f32 %v1074, %v495
      %v1091 = vsub.f32 %v1075, %v498
      %v1092 = vsub.f32 %v1076, %v503
      %v1093 = vsub.f32 %v1077, %v506
      %v1094 = vsub.f32 %v1078, %v511
      %v1095 = vsub.f32 %v1079, %v514
      %v1096 = vsub.f32 %v1080, %v519
      %v1097 = vsub.f32 %v1081, %v522
      %v1098 = vsub.f32 %v1082, %v527
      %v1099 = vsub.f32 %v1083, %v530
      %v1100 = vpack.c.bf16 %v1085, %v1084
      %v1101 = vpack.c.bf16 %v1087, %v1086
      %v1102 = vpack.c.bf16 %v1089, %v1088
      %v1103 = vpack.c.bf16 %v1091, %v1090
      %v1104 = vpack.c.bf16 %v1093, %v1092
      %v1105 = vpack.c.bf16 %v1095, %v1094
      %v1106 = vpack.c.bf16 %v1097, %v1096
      %v1107 = vpack.c.bf16 %v1099, %v1098
      %1108 = vmatprep.subr.bf16.mxu0 0
      %1109 = vmatpush1.bf16.msra.mxu0 %v666
      %1110 = vmatprep.subr.bf16.mxu0 0
      %1111 = vmatpush1.bf16.msra.mxu0 %v667
      %1112 = vmatprep.subr.bf16.mxu0 0
      %1113 = vmatpush1.bf16.msra.mxu0 %v668
      %1114 = vmatprep.subr.bf16.mxu0 0
      %1115 = vmatpush1.bf16.msra.mxu0 %v669
      %1116 = vmatprep.subr.bf16.mxu0 0
      %1117 = vmatpush1.bf16.msra.mxu0 %v670
      %1118 = vmatprep.subr.bf16.mxu0 0
      %1119 = vmatpush1.bf16.msra.mxu0 %v671
      %1120 = vmatprep.subr.bf16.mxu0 0
      %1121 = vmatpush1.bf16.msra.mxu0 %v672
      %1122 = vmatprep.subr.bf16.mxu0 0
      %1123 = vmatpush1.bf16.msra.mxu0 %v673
      %1124 = vmatprep.subr.bf16.mxu0 0
      %1125 = vmatpush1.bf16.msra.mxu0 0
      %1126 = vmatprep.subr.bf16.mxu0 0
      %1127 = vmatpush1.bf16.msra.mxu0 0
      %1128 = vmatprep.subr.bf16.mxu0 0
      %1129 = vmatpush1.bf16.msra.mxu0 0
      %1130 = vmatprep.subr.bf16.mxu0 0
      %1131 = vmatpush1.bf16.msra.mxu0 0
      %1132 = vmatprep.subr.bf16.mxu0 0
      %1133 = vmatpush1.bf16.msra.mxu0 0
      %1134 = vmatprep.subr.bf16.mxu0 0
      %1135 = vmatpush1.bf16.msra.mxu0 0
      %1136 = vmatprep.subr.bf16.mxu0 0
      %1137 = vmatpush1.bf16.msra.mxu0 0
      %1138 = vmatprep.subr.bf16.mxu0 0
      %1139 = vmatpush1.bf16.msra.mxu0 0
      %1140 = vmatprep.mubr.bf16.mxu0 0
      %1141 = vmatmul.mubr.bf16.gmra.mrb[0].mxu0 %v1100
      %v1142 = vpop.f32.mrb[0].mxu0
      %v1143 = vadd.f32 0.0, %v1142
      %v1144 = vpop.f32.mrb[0].mxu0
      %v1145 = vpop.f32.mrb[0].mxu0
      %v1146 = vadd.f32 0.0, %v1145
      %v1147 = vpop.f32.mrb[0].mxu0
      %1148 = vmatprep.mubr.bf16.mxu0 0
      %1149 = vmatmul.mubr.bf16.gmra.mrb[0].mxu0 %v1101
      %v1150 = vpop.f32.mrb[0].mxu0
      %v1151 = vadd.f32 0.0, %v1150
      %v1152 = vpop.f32.mrb[0].mxu0
      %v1153 = vpop.f32.mrb[0].mxu0
      %v1154 = vadd.f32 0.0, %v1153
      %v1155 = vpop.f32.mrb[0].mxu0
      %1156 = vmatprep.mubr.bf16.mxu0 0
      %1157 = vmatmul.mubr.bf16.gmra.mrb[0].mxu0 %v1102
      %v1158 = vpop.f32.mrb[0].mxu0
      %v1159 = vadd.f32 0.0, %v1158
      %v1160 = vpop.f32.mrb[0].mxu0
      %v1161 = vpop.f32.mrb[0].mxu0
      %v1162 = vadd.f32 0.0, %v1161
      %v1163 = vpop.f32.mrb[0].mxu0
      %1164 = vmatprep.mubr.bf16.mxu0 0
      %1165 = vmatmul.mubr.bf16.gmra.mrb[0].mxu0 %v1103
      %v1166 = vpop.f32.mrb[0].mxu0
      %v1167 = vadd.f32 0.0, %v1166
      %v1168 = vpop.f32.mrb[0].mxu0
      %v1169 = vpop.f32.mrb[0].mxu0
      %v1170 = vadd.f32 0.0, %v1169
      %v1171 = vpop.f32.mrb[0].mxu0
      %1172 = vmatprep.mubr.bf16.mxu0 0
      %1173 = vmatmul.mubr.bf16.gmra.mrb[0].mxu0 %v1104
      %v1174 = vpop.f32.mrb[0].mxu0
      %v1175 = vadd.f32 0.0, %v1174
      %v1176 = vpop.f32.mrb[0].mxu0
      %v1177 = vpop.f32.mrb[0].mxu0
      %v1178 = vadd.f32 0.0, %v1177
      %v1179 = vpop.f32.mrb[0].mxu0
      %1180 = vmatprep.mubr.bf16.mxu0 0
      %1181 = vmatmul.mubr.bf16.gmra.mrb[0].mxu0 %v1105
      %v1182 = vpop.f32.mrb[0].mxu0
      %v1183 = vadd.f32 0.0, %v1182
      %v1184 = vpop.f32.mrb[0].mxu0
      %v1185 = vpop.f32.mrb[0].mxu0
      %v1186 = vadd.f32 0.0, %v1185
      %v1187 = vpop.f32.mrb[0].mxu0
      %1188 = vmatprep.mubr.bf16.mxu0 0
      %1189 = vmatmul.mubr.bf16.gmra.mrb[0].mxu0 %v1106
      %v1190 = vpop.f32.mrb[0].mxu0
      %v1191 = vadd.f32 0.0, %v1190
      %v1192 = vpop.f32.mrb[0].mxu0
      %v1193 = vpop.f32.mrb[0].mxu0
      %v1194 = vadd.f32 0.0, %v1193
      %v1195 = vpop.f32.mrb[0].mxu0
      %1196 = vmatprep.mubr.bf16.mxu0 0
      %1197 = vmatmul.mubr.bf16.gmra.mrb[0].mxu0 %v1107
      %v1198 = vpop.f32.mrb[0].mxu0
      %v1199 = vadd.f32 0.0, %v1198
      %v1200 = vpop.f32.mrb[0].mxu0
      %v1201 = vpop.f32.mrb[0].mxu0
      %v1202 = vadd.f32 0.0, %v1201
      %v1203 = vpop.f32.mrb[0].mxu0
      %1204 = vdwg.mxu0
      %v1205 = vpack.c.bf16 %v1146, %v1143
      %v1206 = vpack.c.bf16 %v1154, %v1151
      %v1207 = vpack.c.bf16 %v1162, %v1159
      %v1208 = vpack.c.bf16 %v1170, %v1167
      %v1209 = vpack.c.bf16 %v1178, %v1175
      %v1210 = vpack.c.bf16 %v1186, %v1183
      %v1211 = vpack.c.bf16 %v1194, %v1191
      %v1212 = vpack.c.bf16 %v1202, %v1199
      %1213 = vmatprep.subr.bf16.mxu0 0
      %1214 = vmatpush1.bf16.msra.mxu0 %v1205
      %1215 = vmatprep.subr.bf16.mxu0 0
      %1216 = vmatpush1.bf16.msra.mxu0 %v1206
      %1217 = vmatprep.subr.bf16.mxu0 0
      %1218 = vmatpush1.bf16.msra.mxu0 %v1207
      %1219 = vmatprep.subr.bf16.mxu0 0
      %1220 = vmatpush1.bf16.msra.mxu0 %v1208
      %1221 = vmatprep.subr.bf16.mxu0 0
      %1222 = vmatpush1.bf16.msra.mxu0 %v1209
      %1223 = vmatprep.subr.bf16.mxu0 0
      %1224 = vmatpush1.bf16.msra.mxu0 %v1210
      %1225 = vmatprep.subr.bf16.mxu0 0
      %1226 = vmatpush1.bf16.msra.mxu0 %v1211
      %1227 = vmatprep.subr.bf16.mxu0 0
      %1228 = vmatpush1.bf16.msra.mxu0 %v1212
      %1229 = vmatprep.subr.bf16.mxu0 0
      %1230 = vmatpush1.bf16.msra.mxu0 0
      %1231 = vmatprep.subr.bf16.mxu0 0
      %1232 = vmatpush1.bf16.msra.mxu0 0
      %1233 = vmatprep.subr.bf16.mxu0 0
      %1234 = vmatpush1.bf16.msra.mxu0 0
      %1235 = vmatprep.subr.bf16.mxu0 0
      %1236 = vmatpush1.bf16.msra.mxu0 0
      %1237 = vmatprep.subr.bf16.mxu0 0
      %1238 = vmatpush1.bf16.msra.mxu0 0
      %1239 = vmatprep.subr.bf16.mxu0 0
      %1240 = vmatpush1.bf16.msra.mxu0 0
      %1241 = vmatprep.subr.bf16.mxu0 0
      %1242 = vmatpush1.bf16.msra.mxu0 0
      %1243 = vmatprep.subr.bf16.mxu0 0
      %1244 = vmatpush1.bf16.msra.mxu0 0
      %1245 = vmatprep.mubr.bf16.mxu0 0
      %1246 = vmatmul.mubr.bf16.gmra.mrb[0].mxu0 %v819
      %v1247 = vpop.f32.mrb[0].mxu0
      %v1248 = vadd.f32 0.0, %v1247
      %v1249 = vpop.f32.mrb[0].mxu0
      %v1250 = vpop.f32.mrb[0].mxu0
      %v1251 = vadd.f32 0.0, %v1250
      %v1252 = vpop.f32.mrb[0].mxu0
      %1253 = vmatprep.mubr.bf16.mxu0 0
      %1254 = vmatmul.mubr.bf16.gmra.mrb[0].mxu0 %v820
      %v1255 = vpop.f32.mrb[0].mxu0
      %v1256 = vadd.f32 0.0, %v1255
      %v1257 = vpop.f32.mrb[0].mxu0
      %v1258 = vpop.f32.mrb[0].mxu0
      %v1259 = vadd.f32 0.0, %v1258
      %v1260 = vpop.f32.mrb[0].mxu0
      %1261 = vmatprep.mubr.bf16.mxu0 0
      %1262 = vmatmul.mubr.bf16.gmra.mrb[0].mxu0 %v821
      %v1263 = vpop.f32.mrb[0].mxu0
      %v1264 = vadd.f32 0.0, %v1263
      %v1265 = vpop.f32.mrb[0].mxu0
      %v1266 = vpop.f32.mrb[0].mxu0
      %v1267 = vadd.f32 0.0, %v1266
      %v1268 = vpop.f32.mrb[0].mxu0
      %1269 = vmatprep.mubr.bf16.mxu0 0
      %1270 = vmatmul.mubr.bf16.gmra.mrb[0].mxu0 %v822
      %v1271 = vpop.f32.mrb[0].mxu0
      %v1272 = vadd.f32 0.0, %v1271
      %v1273 = vpop.f32.mrb[0].mxu0
      %v1274 = vpop.f32.mrb[0].mxu0
      %v1275 = vadd.f32 0.0, %v1274
      %v1276 = vpop.f32.mrb[0].mxu0
      %1277 = vmatprep.mubr.bf16.mxu0 0
      %1278 = vmatmul.mubr.bf16.gmra.mrb[0].mxu0 %v823
      %v1279 = vpop.f32.mrb[0].mxu0
      %v1280 = vadd.f32 0.0, %v1279
      %v1281 = vpop.f32.mrb[0].mxu0
      %v1282 = vpop.f32.mrb[0].mxu0
      %v1283 = vadd.f32 0.0, %v1282
      %v1284 = vpop.f32.mrb[0].mxu0
      %1285 = vmatprep.mubr.bf16.mxu0 0
      %1286 = vmatmul.mubr.bf16.gmra.mrb[0].mxu0 %v824
      %v1287 = vpop.f32.mrb[0].mxu0
      %v1288 = vadd.f32 0.0, %v1287
      %v1289 = vpop.f32.mrb[0].mxu0
      %v1290 = vpop.f32.mrb[0].mxu0
      %v1291 = vadd.f32 0.0, %v1290
      %v1292 = vpop.f32.mrb[0].mxu0
      %1293 = vmatprep.mubr.bf16.mxu0 0
      %1294 = vmatmul.mubr.bf16.gmra.mrb[0].mxu0 %v825
      %v1295 = vpop.f32.mrb[0].mxu0
      %v1296 = vadd.f32 0.0, %v1295
      %v1297 = vpop.f32.mrb[0].mxu0
      %v1298 = vpop.f32.mrb[0].mxu0
      %v1299 = vadd.f32 0.0, %v1298
      %v1300 = vpop.f32.mrb[0].mxu0
      %1301 = vmatprep.mubr.bf16.mxu0 0
      %1302 = vmatmul.mubr.bf16.gmra.mrb[0].mxu0 %v826
      %v1303 = vpop.f32.mrb[0].mxu0
      %v1304 = vadd.f32 0.0, %v1303
      %v1305 = vpop.f32.mrb[0].mxu0
      %v1306 = vpop.f32.mrb[0].mxu0
      %v1307 = vadd.f32 0.0, %v1306
      %v1308 = vpop.f32.mrb[0].mxu0
      %1309 = vdwg.mxu0
      %v1310 = vsub.f32 %v1248, %v1036
      %v1311 = vsub.f32 %v1251, %v1037
      %v1312 = vsub.f32 %v1256, %v1038
      %v1313 = vsub.f32 %v1259, %v1039
      %v1314 = vsub.f32 %v1264, %v1040
      %v1315 = vsub.f32 %v1267, %v1041
      %v1316 = vsub.f32 %v1272, %v1042
      %v1317 = vsub.f32 %v1275, %v1043
      %v1318 = vsub.f32 %v1280, %v1044
      %v1319 = vsub.f32 %v1283, %v1045
      %v1320 = vsub.f32 %v1288, %v1046
      %v1321 = vsub.f32 %v1291, %v1047
      %v1322 = vsub.f32 %v1296, %v1048
      %v1323 = vsub.f32 %v1299, %v1049
      %v1324 = vsub.f32 %v1304, %v1050
      %v1325 = vsub.f32 %v1307, %v1051
      %v1326 = vmul.f32 %v1310, 2.0
      %v1327 = vmul.f32 %v1311, 2.0
      %v1328 = vmul.f32 %v1312, 2.0
      %v1329 = vmul.f32 %v1313, 2.0
      %v1330 = vmul.f32 %v1314, 2.0
      %v1331 = vmul.f32 %v1315, 2.0
      %v1332 = vmul.f32 %v1316, 2.0
      %v1333 = vmul.f32 %v1317, 2.0
      %v1334 = vmul.f32 %v1318, 2.0
      %v1335 = vmul.f32 %v1319, 2.0
      %v1336 = vmul.f32 %v1320, 2.0
      %v1337 = vmul.f32 %v1321, 2.0
      %v1338 = vmul.f32 %v1322, 2.0
      %v1339 = vmul.f32 %v1323, 2.0
      %v1340 = vmul.f32 %v1324, 2.0
      %v1341 = vmul.f32 %v1325, 2.0
      %v1342 = vadd.f32 %v1326, %v964
      %v1343 = vadd.f32 %v1327, %v965
      %v1344 = vadd.f32 %v1328, %v966
      %v1345 = vadd.f32 %v1329, %v967
      %v1346 = vadd.f32 %v1330, %v968
      %v1347 = vadd.f32 %v1331, %v969
      %v1348 = vadd.f32 %v1332, %v970
      %v1349 = vadd.f32 %v1333, %v971
      %v1350 = vadd.f32 %v1334, %v972
      %v1351 = vadd.f32 %v1335, %v973
      %v1352 = vadd.f32 %v1336, %v974
      %v1353 = vadd.f32 %v1337, %v975
      %v1354 = vadd.f32 %v1338, %v976
      %v1355 = vadd.f32 %v1339, %v977
      %v1356 = vadd.f32 %v1340, %v978
      %v1357 = vadd.f32 %v1341, %v979
      %v1358 = vsub.f32 %v964, %v1342
      %v1359 = vsub.f32 %v965, %v1343
      %v1360 = vsub.f32 %v966, %v1344
      %v1361 = vsub.f32 %v967, %v1345
      %v1362 = vsub.f32 %v968, %v1346
      %v1363 = vsub.f32 %v969, %v1347
      %v1364 = vsub.f32 %v970, %v1348
      %v1365 = vsub.f32 %v971, %v1349
      %v1366 = vsub.f32 %v972, %v1350
      %v1367 = vsub.f32 %v973, %v1351
      %v1368 = vsub.f32 %v974, %v1352
      %v1369 = vsub.f32 %v975, %v1353
      %v1370 = vsub.f32 %v976, %v1354
      %v1371 = vsub.f32 %v977, %v1355
      %v1372 = vsub.f32 %v978, %v1356
      %v1373 = vsub.f32 %v979, %v1357
      %v1374 = vand.u32 2147483647, %v1358
      %v1375 = vand.u32 2147483647, %v1359
      %v1376 = vand.u32 2147483647, %v1360
      %v1377 = vand.u32 2147483647, %v1361
      %v1378 = vand.u32 2147483647, %v1362
      %v1379 = vand.u32 2147483647, %v1363
      %v1380 = vand.u32 2147483647, %v1364
      %v1381 = vand.u32 2147483647, %v1365
      %v1382 = vand.u32 2147483647, %v1366
      %v1383 = vand.u32 2147483647, %v1367
      %v1384 = vand.u32 2147483647, %v1368
      %v1385 = vand.u32 2147483647, %v1369
      %v1386 = vand.u32 2147483647, %v1370
      %v1387 = vand.u32 2147483647, %v1371
      %v1388 = vand.u32 2147483647, %v1372
      %v1389 = vand.u32 2147483647, %v1373
      %v1390 = vmax.f32 %v1374, %v1378
      %v1391 = vmax.f32 %v1375, %v1379
      %v1392 = vmax.f32 %v1376, %v1380
      %v1393 = vmax.f32 %v1377, %v1381
      %v1394 = vmax.f32 %v1390, %v1382
      %v1395 = vmax.f32 %v1391, %v1383
      %v1396 = vmax.f32 %v1392, %v1384
      %v1397 = vmax.f32 %v1393, %v1385
      %v1398 = vmax.f32 %v1394, %v1386
      %v1399 = vmax.f32 %v1395, %v1387
      %v1400 = vmax.f32 %v1396, %v1388
      %v1401 = vmax.f32 %v1397, %v1389
      %v1402 = vmax.f32 %v1398, %v1399
      %v1403 = vmax.f32 %v1400, %v1401
      %v1404 = vmax.f32 %v1402, %v1403
      %1405 = vmax.xlane.f32.xlu0 %v1404
      %v1406 = vpop.xlane.xlu0 %1405
      %v1407 = vrot.slane %v1406, 4
      %v1408 = vmax.f32 %v1406, %v1407
      %v1409 = vrot.slane %v1408, 2
      %v1410 = vmax.f32 %v1408, %v1409
      %v1411 = vrot.slane %v1410, 1
      %v1412 = vmax.f32 %v1410, %v1411
      %s1413 = vtos %v1412
      %s1414 = sadd.s32 %s551, 1
      %p1415 = scmp.gt.f32.partialorder %s1035, 0.001
      %p1416 = scmp.lt.s32.totalorder %s1414, 50
      %p1417 = sweird.f32 %s1035
      %p1418 = pneg %p1417
      %p1419 = pnand %p1416, %p1418
      %p1420 = pneg %p1419
      %p1421 = pnand %p1415, %p1420
      %p1422 = pneg %p1421
      %s1423 = scalar_select %p1422, 1, 0
      %v1424 = vstv %s1423
      %vm1425 = vcmp.eq.s32.totalorder %v1424, 1
      %v1426 = vsel %vm1425, %v1342, %v964
      %v1427 = vsel %vm1425, %v1343, %v965
      %v1428 = vsel %vm1425, %v1344, %v966
      %v1429 = vsel %vm1425, %v1345, %v967
      %v1430 = vsel %vm1425, %v1346, %v968
      %v1431 = vsel %vm1425, %v1347, %v969
      %v1432 = vsel %vm1425, %v1348, %v970
      %v1433 = vsel %vm1425, %v1349, %v971
      %v1434 = vsel %vm1425, %v1350, %v972
      %v1435 = vsel %vm1425, %v1351, %v973
      %v1436 = vsel %vm1425, %v1352, %v974
      %v1437 = vsel %vm1425, %v1353, %v975
      %v1438 = vsel %vm1425, %v1354, %v976
      %v1439 = vsel %vm1425, %v1355, %v977
      %v1440 = vsel %vm1425, %v1356, %v978
      %v1441 = vsel %vm1425, %v1357, %v979
      %s1442 = scalar_select %p1422, %s1413, %s1035
      %s1443 = scalar_select %p1422, 2, 1
      %s1444 = sadd.s32 %s551, %s1443
    $region54: #{tpu_custom_call.1} parent=1 // loop_footer
      _
    $region55: #{tpu_custom_call.1} parent=1 // loop_footer_branch
      %533 = sbr.rel target = $region51
    $region56: #{tpu_custom_call.1} parent=1 // loop_exit
      _
    %v1445 = vmax.f32 %v534, 0.0
    %v1446 = vmax.f32 %v535, 0.0
    %v1447 = vmax.f32 %v536, 0.0
    %v1448 = vmax.f32 %v537, 0.0
    %v1449 = vmax.f32 %v538, 0.0
    %v1450 = vmax.f32 %v539, 0.0
    %v1451 = vmax.f32 %v540, 0.0
    %v1452 = vmax.f32 %v541, 0.0
    %v1453 = vmax.f32 %v542, 0.0
    %v1454 = vmax.f32 %v543, 0.0
    %v1455 = vmax.f32 %v544, 0.0
    %v1456 = vmax.f32 %v545, 0.0
    %v1457 = vmax.f32 %v546, 0.0
    %v1458 = vmax.f32 %v547, 0.0
    %v1459 = vmax.f32 %v548, 0.0
    %v1460 = vmax.f32 %v549, 0.0
    %v1461 = vpack.c.bf16 %v1446, %v1445
    %v1462 = vpack.c.bf16 %v1448, %v1447
    %v1463 = vpack.c.bf16 %v1450, %v1449
    %v1464 = vpack.c.bf16 %v1452, %v1451
    %v1465 = vpack.c.bf16 %v1454, %v1453
    %v1466 = vpack.c.bf16 %v1456, %v1455
    %v1467 = vpack.c.bf16 %v1458, %v1457
    %v1468 = vpack.c.bf16 %v1460, %v1459
    %v1469 = vld [vmem:[#allocation11] sm:$0xf]
    %v1470 = vld [vmem:[#allocation11 + $0x4] sm:$0xf]
    %v1471 = vld [vmem:[#allocation11 + $0x8] sm:$0xf]
    %v1472 = vld [vmem:[#allocation11 + $0xc] sm:$0xf]
    %v1473 = vld [vmem:[#allocation11 + $0x10] sm:$0xf]
    %v1474 = vld [vmem:[#allocation11 + $0x14] sm:$0xf]
    %v1475 = vld [vmem:[#allocation11 + $0x18] sm:$0xf]
    %v1476 = vld [vmem:[#allocation11 + $0x1c] sm:$0xf]
    %v1477 = vld [vmem:[#allocation11 + $0x20] sm:$0xf]
    %v1478 = vld [vmem:[#allocation11 + $0x24] sm:$0xf]
    %v1479 = vld [vmem:[#allocation11 + $0x28] sm:$0xf]
    %v1480 = vld [vmem:[#allocation11 + $0x2c] sm:$0xf]
    %v1481 = vld [vmem:[#allocation11 + $0x30] sm:$0xf]
    %v1482 = vld [vmem:[#allocation11 + $0x34] sm:$0xf]
    %v1483 = vld [vmem:[#allocation11 + $0x38] sm:$0xf]
    %v1484 = vld [vmem:[#allocation11 + $0x3c] sm:$0xf]
    %v1501 = vunpack.c.l.b16 %v1469
    %v1502 = vunpack.c.l.b16 %v1470
    %v1503 = vunpack.c.l.b16 %v1471
    %v1504 = vunpack.c.l.b16 %v1472
    %v1505 = vunpack.c.l.b16 %v1473
    %v1506 = vunpack.c.l.b16 %v1474
    %v1507 = vunpack.c.l.b16 %v1475
    %v1508 = vunpack.c.l.b16 %v1476
    %v1509 = vunpack.c.l.b16 %v1477
    %v1510 = vunpack.c.l.b16 %v1478
    %v1511 = vunpack.c.l.b16 %v1479
    %v1512 = vunpack.c.l.b16 %v1480
    %v1513 = vunpack.c.l.b16 %v1481
    %v1514 = vunpack.c.l.b16 %v1482
    %v1515 = vunpack.c.l.b16 %v1483
    %v1516 = vunpack.c.l.b16 %v1484
    %v1517 = vpack.c.b16 %v1502, %v1501
    %v1518 = vpack.c.b16 %v1504, %v1503
    %v1519 = vpack.c.b16 %v1506, %v1505
    %v1520 = vpack.c.b16 %v1508, %v1507
    %v1521 = vpack.c.b16 %v1510, %v1509
    %v1522 = vpack.c.b16 %v1512, %v1511
    %v1523 = vpack.c.b16 %v1514, %v1513
    %v1524 = vpack.c.b16 %v1516, %v1515
    %1533 = vmatprep.subr.bf16.mxu0 0
    %1534 = vmatpush1.bf16.msra.mxu0 %v1517
    %1535 = vmatprep.subr.bf16.mxu0 0
    %1536 = vmatpush1.bf16.msra.mxu0 %v1518
    %1537 = vmatprep.subr.bf16.mxu0 0
    %1538 = vmatpush1.bf16.msra.mxu0 %v1519
    %1539 = vmatprep.subr.bf16.mxu0 0
    %1540 = vmatpush1.bf16.msra.mxu0 %v1520
    %1541 = vmatprep.subr.bf16.mxu0 0
    %1542 = vmatpush1.bf16.msra.mxu0 %v1521
    %1543 = vmatprep.subr.bf16.mxu0 0
    %1544 = vmatpush1.bf16.msra.mxu0 %v1522
    %1545 = vmatprep.subr.bf16.mxu0 0
    %1546 = vmatpush1.bf16.msra.mxu0 %v1523
    %1547 = vmatprep.subr.bf16.mxu0 0
    %1548 = vmatpush1.bf16.msra.mxu0 %v1524
    %1549 = vmatprep.subr.bf16.mxu0 0
    %1550 = vmatpush1.bf16.msra.mxu0 0
    %1551 = vmatprep.subr.bf16.mxu0 0
    %1552 = vmatpush1.bf16.msra.mxu0 0
    %1553 = vmatprep.subr.bf16.mxu0 0
    %1554 = vmatpush1.bf16.msra.mxu0 0
    %1555 = vmatprep.subr.bf16.mxu0 0
    %1556 = vmatpush1.bf16.msra.mxu0 0
    %1557 = vmatprep.subr.bf16.mxu0 0
    %1558 = vmatpush1.bf16.msra.mxu0 0
    %1559 = vmatprep.subr.bf16.mxu0 0
    %1560 = vmatpush1.bf16.msra.mxu0 0
    %1561 = vmatprep.subr.bf16.mxu0 0
    %1562 = vmatpush1.bf16.msra.mxu0 0
    %1563 = vmatprep.subr.bf16.mxu0 0
    %1564 = vmatpush1.bf16.msra.mxu0 0
    %1565 = vmatprep.mubr.bf16.mxu0 0
    %1566 = vmatmul.mubr.bf16.gmra.mrb[0].mxu0 %v1461
    %v1567 = vpop.f32.mrb[0].mxu0
    %v1568 = vadd.f32 0.0, %v1567
    %v1569 = vpop.f32.mrb[0].mxu0
    %v1570 = vpop.f32.mrb[0].mxu0
    %v1571 = vadd.f32 0.0, %v1570
    %v1572 = vpop.f32.mrb[0].mxu0
    %1573 = vmatprep.mubr.bf16.mxu0 0
    %1574 = vmatmul.mubr.bf16.gmra.mrb[0].mxu0 %v1462
    %v1575 = vpop.f32.mrb[0].mxu0
    %v1576 = vadd.f32 0.0, %v1575
    %v1577 = vpop.f32.mrb[0].mxu0
    %v1578 = vpop.f32.mrb[0].mxu0
    %v1579 = vadd.f32 0.0, %v1578
    %v1580 = vpop.f32.mrb[0].mxu0
    %1581 = vmatprep.mubr.bf16.mxu0 0
    %1582 = vmatmul.mubr.bf16.gmra.mrb[0].mxu0 %v1463
    %v1583 = vpop.f32.mrb[0].mxu0
    %v1584 = vadd.f32 0.0, %v1583
    %v1585 = vpop.f32.mrb[0].mxu0
    %v1586 = vpop.f32.mrb[0].mxu0
    %v1587 = vadd.f32 0.0, %v1586
    %v1588 = vpop.f32.mrb[0].mxu0
    %1589 = vmatprep.mubr.bf16.mxu0 0
    %1590 = vmatmul.mubr.bf16.gmra.mrb[0].mxu0 %v1464
    %v1591 = vpop.f32.mrb[0].mxu0
    %v1592 = vadd.f32 0.0, %v1591
    %v1593 = vpop.f32.mrb[0].mxu0
    %v1594 = vpop.f32.mrb[0].mxu0
    %v1595 = vadd.f32 0.0, %v1594
    %v1596 = vpop.f32.mrb[0].mxu0
    %1597 = vmatprep.mubr.bf16.mxu0 0
    %1598 = vmatmul.mubr.bf16.gmra.mrb[0].mxu0 %v1465
    %v1599 = vpop.f32.mrb[0].mxu0
    %v1600 = vadd.f32 0.0, %v1599
    %v1601 = vpop.f32.mrb[0].mxu0
    %v1602 = vpop.f32.mrb[0].mxu0
    %v1603 = vadd.f32 0.0, %v1602
    %v1604 = vpop.f32.mrb[0].mxu0
    %1605 = vmatprep.mubr.bf16.mxu0 0
    %1606 = vmatmul.mubr.bf16.gmra.mrb[0].mxu0 %v1466
    %v1607 = vpop.f32.mrb[0].mxu0
    %v1608 = vadd.f32 0.0, %v1607
    %v1609 = vpop.f32.mrb[0].mxu0
    %v1610 = vpop.f32.mrb[0].mxu0
    %v1611 = vadd.f32 0.0, %v1610
    %v1612 = vpop.f32.mrb[0].mxu0
    %1613 = vmatprep.mubr.bf16.mxu0 0
    %1614 = vmatmul.mubr.bf16.gmra.mrb[0].mxu0 %v1467
    %v1615 = vpop.f32.mrb[0].mxu0
    %v1616 = vadd.f32 0.0, %v1615
    %v1617 = vpop.f32.mrb[0].mxu0
    %v1618 = vpop.f32.mrb[0].mxu0
    %v1619 = vadd.f32 0.0, %v1618
    %v1620 = vpop.f32.mrb[0].mxu0
    %1621 = vmatprep.mubr.bf16.mxu0 0
    %1622 = vmatmul.mubr.bf16.gmra.mrb[0].mxu0 %v1468
    %v1623 = vpop.f32.mrb[0].mxu0
    %v1624 = vadd.f32 0.0, %v1623
    %v1625 = vpop.f32.mrb[0].mxu0
    %v1626 = vpop.f32.mrb[0].mxu0
    %v1627 = vadd.f32 0.0, %v1626
    %v1628 = vpop.f32.mrb[0].mxu0
    %1629 = vdwg.mxu0
    %1630 = vst [vmem:[#allocation13] sm:$0xff] %v1568
    %1631 = vst [vmem:[#allocation13 + $0x8] sm:$0xff] %v1571
    %1632 = vst [vmem:[#allocation13 + $0x10] sm:$0xff] %v1576
    %1633 = vst [vmem:[#allocation13 + $0x18] sm:$0xff] %v1579
    %1634 = vst [vmem:[#allocation13 + $0x20] sm:$0xff] %v1584
    %1635 = vst [vmem:[#allocation13 + $0x28] sm:$0xff] %v1587
    %1636 = vst [vmem:[#allocation13 + $0x30] sm:$0xff] %v1592
    %1637 = vst [vmem:[#allocation13 + $0x38] sm:$0xff] %v1595
    %1638 = vst [vmem:[#allocation13 + $0x40] sm:$0xff] %v1600
    %1639 = vst [vmem:[#allocation13 + $0x48] sm:$0xff] %v1603
    %1640 = vst [vmem:[#allocation13 + $0x50] sm:$0xff] %v1608
    %1641 = vst [vmem:[#allocation13 + $0x58] sm:$0xff] %v1611
    %1642 = vst [vmem:[#allocation13 + $0x60] sm:$0xff] %v1616
    %1643 = vst [vmem:[#allocation13 + $0x68] sm:$0xff] %v1619
    %1644 = vst [vmem:[#allocation13 + $0x70] sm:$0xff] %v1624
    %1645 = vst [vmem:[#allocation13 + $0x78] sm:$0xff] %v1627
    // Predicated region
    $region57: #{tpu_custom_call.1} parent=1 // pred_check
      _
    $region58: #{tpu_custom_call.1} parent=1 // pred_check_branch
      %1647 = sbr.rel (0) target = $region60
    $region59: #{tpu_custom_call.1} parent=1 // pred_region
      %s1649 = ssub.s32 2048, 2048
      %1650 = vsyncadd [#allocation4], %s1649
      %s1651 = sshll.u32 [#allocation13], 4
      %s1652 = int_to_ptr.vmem [resolvable:$true] %s1651
      %1657 = dma.vmem_to_hbm [thread:$0]  %s1652, 2048, %s6, [#allocation4], 128, 128, 8
    $region60: #{tpu_custom_call.1} parent=1 // pred_fallthru
      _
    // Predicated region
    $region61: #{tpu_custom_call.1} parent=1 // pred_check
      _
    $region62: #{tpu_custom_call.1} parent=1 // pred_check_branch
      %1659 = sbr.rel (0) target = $region64
    $region63: #{tpu_custom_call.1} parent=1 // pred_region
      %1660 = dma.done [#allocation4], 2048
    $region64: #{tpu_custom_call.1} parent=1 // pred_fallthru
      _
    %1661 = vsyncpa [#allocation3], 1
    %1662 = vsyncpa [#allocation6], 1
    %1663 = vsyncpa [#allocation9], 1
    %1664 = vsyncpa [#allocation12], 1
    %1665 = vsyncpa [#allocation4], 1

</llo_original>
